<compile_context>
chip_gen: v6e
topology: v6e:2x2x1
jax: 0.10.0
libtpu: 0.0.40
codegen_flags: <defaults>
</compile_context>

<pallas_src>
import numpy as np
import jax
import jax.numpy as jnp
from jax import lax
from jax.experimental import pallas as pl
from jax.experimental.pallas import tpu as pltpu

NEG_SLOPE = 0.2   # LeakyReLU(0.2)
BN_EPS = 1e-5


def _conv_out(h):  # 3x3, stride 2, pad 1
    return (h + 2 - 3) // 2 + 1


# ----------------------------------------------------------------------------
# One-time host-side setup (param-init time, NOT per forward call).
# ----------------------------------------------------------------------------
def build_scorer_constants(params, B, C, H, W):
    Hp, Wp = H + 2, W + 2
    OH1, OW1 = _conv_out(H), _conv_out(W)
    OH2, OW2 = _conv_out(OH1), _conv_out(OW1)
    OH3, OW3 = OH2 // 2, OW2 // 2
    P1, P2, P3 = OH1 * OW1, OH2 * OW2, OH3 * OW3
    # Width of the tap-shifted slabs: largest tap offset is 2*Wp+2, so every
    # slice [off : off+Q] of the padded-flat (Hp*Wp) row stays in bounds.
    Q = Hp * Wp - 2 * Wp - 2
    NP = max(128, ((P3 + 127) // 128) * 128)          # lane-dense padded P3

    # ---- conv1 with BatchNorm2d(1) (inference) folded in -------------------
    w1 = np.asarray(params['w1'], np.float32).reshape(C, 3, 3)
    scale = float(params['bn_gamma']) / np.sqrt(float(params['bn_var']) + BN_EPS)
    shift = float(params['bn_beta']) - float(params['bn_mean']) * scale
    w1_eff = w1 * scale                               # fold BN scale into w1
    bias1 = float(params['b1']) * scale + shift       # fold b1 + BN shift
    w1t = np.transpose(w1_eff, (1, 2, 0)).reshape(9, C)          # tap-major
    offsets = tuple(ky * Wp + kx for ky in range(3) for kx in range(3))

    # ---- conv2 (3x3,s2,p1) + MaxPool2d(2,2) folded into ONE matrix ----------
    w2 = np.asarray(params['w2'], np.float32).reshape(3, 3)
    C2 = np.zeros((P2, P1), np.float32)               # conv2 as linear map
    for i2 in range(OH2):
        for j2 in range(OW2):
            for ky in range(3):
                for kx in range(3):
                    r, s = 2 * i2 + ky - 1, 2 * j2 + kx - 1
                    if 0 <= r < OH1 and 0 <= s < OW1:
                        C2[i2 * OW2 + j2, r * OW1 + s] += w2[ky, kx]
    # conv1 output (i,j) lives at padded-flat position q = 2*i*Wp + 2*j
    qpos = np.array([2 * i * Wp + 2 * j for i in range(OH1) for j in range(OW1)])
    mcomb = np.zeros((Q, 4 * NP), np.float32)
    corner = 0
    for di in range(2):
        for dj in range(2):
            rows = np.array([(2 * i3 + di) * OW2 + (2 * j3 + dj)
                             for i3 in range(OH3) for j3 in range(OW3)])
            A = C2[rows]                               # (P3, P1)
            mcomb[qpos, corner * NP:corner * NP + P3] = A.T
            corner += 1

    return dict(
        B=B, C=C, H=H, W=W, Hp=Hp, Wp=Wp, HpWp=Hp * Wp,
        OH3=OH3, OW3=OW3, P3=P3, Q=Q, NP=NP,
        offsets=offsets, bias1=bias1, bias2=float(params['b2']),
        w1t=jnp.asarray(w1t, jnp.bfloat16),            # (9, C)     bf16 MXU lhs
        mcomb=jnp.asarray(mcomb, jnp.bfloat16),        # (Q, 4*NP)  bf16 MXU rhs
    )


# ----------------------------------------------------------------------------
# Pallas kernel: one batch element per grid step.
# ----------------------------------------------------------------------------
def _make_scorer_kernel(offsets, q_width, npad, bias1, bias2):
    def kernel(x_ref, w1t_ref, mcomb_ref, o_ref):
        xb = x_ref[0]                                   # (C, Hp*Wp) bf16
        # conv1 (+ folded BN scale): one MXU push, 9 tap planes at all positions.
        z1p = jnp.dot(w1t_ref[...], xb,
                      preferred_element_type=jnp.float32)        # (9, Hp*Wp) f32
        # Combine taps with static lane shifts (window anchored at its padded
        # top-left corner); stride-2 subsampling happens in the next matmul.
        z1 = z1p[0:1, offsets[0]:offsets[0] + q_width]
        for t in range(1, 9):
            z1 = z1 + z1p[t:t + 1, offsets[t]:offsets[t] + q_width]
        z1 = z1 + bias1                                 # conv1 bias + BN shift
        z1 = jnp.where(z1 > 0, z1, NEG_SLOPE * z1)      # LeakyReLU(0.2)
        # conv2 + 2x2 maxpool folded: one matmul to the 4 corner candidates.
        cand = jnp.dot(z1.astype(jnp.bfloat16), mcomb_ref[...],
                       preferred_element_type=jnp.float32)       # (1, 4*NP) f32
        m = cand[:, 0:npad]
        for c in range(1, 4):
            m = jnp.maximum(m, cand[:, c * npad:(c + 1) * npad])
        o_ref[0] = m + bias2                            # conv2 bias after max
    return kernel


def scorer_forward(consts, x_low):
    """MapBlock(512->1) on x_low (B, 512, H, W) -> scores_2d (B, H//8, W//8)."""
    B, C, H, W = x_low.shape
    HpWp, Q, NP, P3 = consts['HpWp'], consts['Q'], consts['NP'], consts['P3']

    # Only wrapper-side data movement: zero-pad + bf16 cast + free reshape.
    x_pad = jnp.pad(x_low, ((0, 0), (0, 0), (1, 1), (1, 1)))
    x_pad = x_pad.astype(jnp.bfloat16).reshape(B, C, HpWp)

    kernel = _make_scorer_kernel(consts['offsets'], Q, NP,
                                 consts['bias1'], consts['bias2'])
    out = pl.pallas_call(
        kernel,
        out_shape=jax.ShapeDtypeStruct((B, 1, NP), jnp.float32),
        grid=(B,),
        in_specs=[
            pl.BlockSpec((1, C, HpWp), lambda b: (b, 0, 0)),     # x (per batch)
            pl.BlockSpec((9, C), lambda b: (0, 0)),              # conv1 taps
            pl.BlockSpec((Q, 4 * NP), lambda b: (0, 0)),         # conv2+pool
        ],
        out_specs=pl.BlockSpec((1, 1, NP), lambda b: (b, 0, 0)),
        compiler_params=pltpu.CompilerParams(
            dimension_semantics=("parallel",)),
    )(x_pad, consts['w1t'], consts['mcomb'])

    return out[:, 0, :P3].reshape(B, consts['OH3'], consts['OW3'])


def selector_forward(consts, x_high, x_low):
    """Mirror of Selector.forward (which is truncated after computing scores_1d)."""
    b, c = x_high.shape[:2]
    del c
    scores_2d = scorer_forward(consts, x_low)          # == scorer(x_low).squeeze(1)
    scores_1d = scores_2d.reshape(b, -1)
    # TODO(synk): reference forward() is truncated right after scores_1d; the
    # PerturbedTopK / patch-extraction path is never reached there.
    return scores_2d, scores_1d


def init_params(key):
    k1, k2 = jax.random.split(key, 2)
    return dict(
        w1=0.02 * jax.random.normal(k1, (1, 512, 3, 3), jnp.float32),
        b1=jnp.float32(0.01),
        w2=0.1 * jax.random.normal(k2, (1, 1, 3, 3), jnp.float32),
        b2=jnp.float32(-0.02),
        bn_gamma=jnp.float32(1.3),
        bn_beta=jnp.float32(0.1),
        bn_mean=jnp.float32(0.05),
        bn_var=jnp.float32(0.9),
    )


def _ref_scorer(x_low, p):
    """Pure-JAX reference of MapBlock(512->1) for correctness checking."""
    dn = ('NCHW', 'OIHW', 'NCHW')
    y = lax.conv_general_dilated(x_low, p['w1'], (2, 2), ((1, 1), (1, 1)),
                                 dimension_numbers=dn,
                                 precision=lax.Precision.HIGHEST) + p['b1']
    scale = p['bn_gamma'] / jnp.sqrt(p['bn_var'] + BN_EPS)
    shift = p['bn_beta'] - p['bn_mean'] * scale
    y = y * scale + shift
    y = jnp.where(y > 0, y, NEG_SLOPE * y)
    y = lax.conv_general_dilated(y, p['w2'], (2, 2), ((1, 1), (1, 1)),
                                 dimension_numbers=dn,
                                 precision=lax.Precision.HIGHEST) + p['b2']
    y = lax.reduce_window(y, -jnp.inf, lax.max, (1, 1, 2, 2), (1, 1, 2, 2), 'VALID')
    return y[:, 0]


if __name__ == "__main__":
    key = jax.random.PRNGKey(0)
    kp, kh, kl = jax.random.split(key, 3)
    params = init_params(kp)

    B, H, W = 2, 16, 16
    x_high = jax.random.normal(kh, (B, 3, 32, 32), jnp.float32)   # only (b, c) used
    x_low = jax.random.normal(kl, (B, 512, H, W), jnp.float32)    # scorer input

    # Host-side constant construction happens exactly once here (init time).
    consts = build_scorer_constants(params, B, 512, H, W)

    scores_2d, scores_1d = selector_forward(consts, x_high, x_low)
    scores_2d = jax.block_until_ready(scores_2d)
    scores_1d = jax.block_until_ready(scores_1d)

    assert scores_2d.shape == (B, H // 8, W // 8)
    assert scores_1d.shape == (B, (H // 8) * (W // 8))

    # Tolerance sized for the single-pass bf16 MXU path (f32 accumulation).
    ref = np.asarray(_ref_scorer(x_low, params))
    if not np.allclose(np.asarray(scores_2d), ref, rtol=3e-2, atol=3e-2):
        raise AssertionError("Pallas scorer does not match JAX reference")

    print("KERNEL_OK")
</pallas_src>

<mosaic_0001>
module attributes {stable_mosaic.version = 11 : i64} {
  func.func @kernel(%arg0: i32, %arg1: memref<1x512x324xbf16, #tpu.memory_space<vmem>>, %arg2: memref<9x512xbf16, #tpu.memory_space<vmem>>, %arg3: memref<286x512xbf16, #tpu.memory_space<vmem>>, %arg4: memref<1x1x128xf32, #tpu.memory_space<vmem>>) attributes {dimension_semantics = [#tpu.dimension_semantics<parallel>], iteration_bounds = array<i64: 2>, scalar_prefetch = 0 : i64, scratch_operands = 0 : i64, tpu.core_type = #tpu.core_type<tc>, window_params = [{transform_indices = @transform_0, window_bounds = array<i64: 1, 512, 324>}, {pipeline_mode = #tpu.pipeline_mode<synchronous>, transform_indices = @transform_1, window_bounds = array<i64: 9, 512>}, {pipeline_mode = #tpu.pipeline_mode<synchronous>, transform_indices = @transform_2, window_bounds = array<i64: 286, 512>}, {transform_indices = @transform_3, window_bounds = array<i64: 1, 1, 128>}]} {
    %c0 = arith.constant 0 : index
    %c0_0 = arith.constant 0 : index
    %c0_1 = arith.constant 0 : index
    %0 = vector.load %arg1[%c0, %c0_0, %c0_1] : memref<1x512x324xbf16, #tpu.memory_space<vmem>>, vector<1x512x324xbf16>
    %1 = vector.shape_cast %0 : vector<1x512x324xbf16> to vector<512x324xbf16>
    %c0_2 = arith.constant 0 : index
    %c0_3 = arith.constant 0 : index
    %2 = vector.load %arg2[%c0_2, %c0_3] : memref<9x512xbf16, #tpu.memory_space<vmem>>, vector<9x512xbf16>
    %cst = arith.constant dense<0.000000e+00> : vector<9x324xf32>
    %3 = tpu.matmul %2, %1, %cst {dimension_numbers = #tpu.dot_dimension_numbers<[1], [0], [0], [1], [0, 0, 1, 1], [], []>} : vector<9x512xbf16>, vector<512x324xbf16>, vector<9x324xf32> -> vector<9x324xf32>
    %4 = vector.extract_strided_slice %3 {offsets = [0, 0], sizes = [1, 286], strides = [1, 1]} : vector<9x324xf32> to vector<1x286xf32>
    %5 = vector.extract_strided_slice %3 {offsets = [1, 1], sizes = [1, 286], strides = [1, 1]} : vector<9x324xf32> to vector<1x286xf32>
    %6 = arith.addf %4, %5 : vector<1x286xf32>
    %7 = vector.extract_strided_slice %3 {offsets = [2, 2], sizes = [1, 286], strides = [1, 1]} : vector<9x324xf32> to vector<1x286xf32>
    %8 = arith.addf %6, %7 : vector<1x286xf32>
    %9 = vector.extract_strided_slice %3 {offsets = [3, 18], sizes = [1, 286], strides = [1, 1]} : vector<9x324xf32> to vector<1x286xf32>
    %10 = arith.addf %8, %9 : vector<1x286xf32>
    %11 = vector.extract_strided_slice %3 {offsets = [4, 19], sizes = [1, 286], strides = [1, 1]} : vector<9x324xf32> to vector<1x286xf32>
    %12 = arith.addf %10, %11 : vector<1x286xf32>
    %13 = vector.extract_strided_slice %3 {offsets = [5, 20], sizes = [1, 286], strides = [1, 1]} : vector<9x324xf32> to vector<1x286xf32>
    %14 = arith.addf %12, %13 : vector<1x286xf32>
    %15 = vector.extract_strided_slice %3 {offsets = [6, 36], sizes = [1, 286], strides = [1, 1]} : vector<9x324xf32> to vector<1x286xf32>
    %16 = arith.addf %14, %15 : vector<1x286xf32>
    %17 = vector.extract_strided_slice %3 {offsets = [7, 37], sizes = [1, 286], strides = [1, 1]} : vector<9x324xf32> to vector<1x286xf32>
    %18 = arith.addf %16, %17 : vector<1x286xf32>
    %19 = vector.extract_strided_slice %3 {offsets = [8, 38], sizes = [1, 286], strides = [1, 1]} : vector<9x324xf32> to vector<1x286xf32>
    %20 = arith.addf %18, %19 : vector<1x286xf32>
    %cst_4 = arith.constant 0.0451874919 : f32
    %21 = vector.broadcast %cst_4 : f32 to vector<1x286xf32>
    %22 = arith.addf %20, %21 : vector<1x286xf32>
    %cst_5 = arith.constant 0.000000e+00 : f32
    %23 = vector.broadcast %cst_5 : f32 to vector<1x286xf32>
    %24 = arith.cmpf ogt, %22, %23 : vector<1x286xf32>
    %cst_6 = arith.constant 2.000000e-01 : f32
    %25 = vector.broadcast %cst_6 : f32 to vector<1x286xf32>
    %26 = arith.mulf %25, %22 : vector<1x286xf32>
    %27 = arith.select %24, %22, %26 : vector<1x286xi1>, vector<1x286xf32>
    %28 = arith.truncf %27 : vector<1x286xf32> to vector<1x286xbf16>
    %c0_7 = arith.constant 0 : index
    %c0_8 = arith.constant 0 : index
    %29 = vector.load %arg3[%c0_7, %c0_8] : memref<286x512xbf16, #tpu.memory_space<vmem>>, vector<286x512xbf16>
    %cst_9 = arith.constant dense<0.000000e+00> : vector<1x512xf32>
    %30 = tpu.matmul %28, %29, %cst_9 {dimension_numbers = #tpu.dot_dimension_numbers<[1], [0], [0], [1], [0, 0, 1, 1], [], []>} : vector<1x286xbf16>, vector<286x512xbf16>, vector<1x512xf32> -> vector<1x512xf32>
    %31 = vector.extract_strided_slice %30 {offsets = [0, 0], sizes = [1, 128], strides = [1, 1]} : vector<1x512xf32> to vector<1x128xf32>
    %32 = vector.extract_strided_slice %30 {offsets = [0, 128], sizes = [1, 128], strides = [1, 1]} : vector<1x512xf32> to vector<1x128xf32>
    %33 = arith.maximumf %31, %32 : vector<1x128xf32>
    %34 = vector.extract_strided_slice %30 {offsets = [0, 256], sizes = [1, 128], strides = [1, 1]} : vector<1x512xf32> to vector<1x128xf32>
    %35 = arith.maximumf %33, %34 : vector<1x128xf32>
    %36 = vector.extract_strided_slice %30 {offsets = [0, 384], sizes = [1, 128], strides = [1, 1]} : vector<1x512xf32> to vector<1x128xf32>
    %37 = arith.maximumf %35, %36 : vector<1x128xf32>
    %cst_10 = arith.constant -2.000000e-02 : f32
    %38 = vector.broadcast %cst_10 : f32 to vector<1x128xf32>
    %39 = arith.addf %37, %38 : vector<1x128xf32>
    %c0_11 = arith.constant 0 : index
    %c0_12 = arith.constant 0 : index
    %c0_13 = arith.constant 0 : index
    %40 = vector.load %arg4[%c0_11, %c0_12, %c0_13] : memref<1x1x128xf32, #tpu.memory_space<vmem>>, vector<1x1x128xf32>
    %41 = vector.shape_cast %40 : vector<1x1x128xf32> to vector<1x128xf32>
    %42 = vector.shape_cast %39 : vector<1x128xf32> to vector<1x1x128xf32>
    tpu.vector_store %arg4[%c0_11, %c0_12, %c0_13], %42 {strides = array<i32>} : memref<1x1x128xf32, #tpu.memory_space<vmem>>, vector<1x1x128xf32>,
    return
  }
  func.func @transform_0(%arg0: i32) -> (i32, i32, i32) {
    %c0_i32 = arith.constant 0 : i32
    %c0_i32_0 = arith.constant 0 : i32
    %c0_i32_1 = arith.constant 0 : i32
    return %arg0, %c0_i32, %c0_i32_0 : i32, i32, i32
  }
  func.func @transform_1(%arg0: i32) -> (i32, i32) {
    %c0_i32 = arith.constant 0 : i32
    %c0_i32_0 = arith.constant 0 : i32
    %c0_i32_1 = arith.constant 0 : i32
    return %c0_i32, %c0_i32_0 : i32, i32
  }
  func.func @transform_2(%arg0: i32) -> (i32, i32) {
    %c0_i32 = arith.constant 0 : i32
    %c0_i32_0 = arith.constant 0 : i32
    %c0_i32_1 = arith.constant 0 : i32
    return %c0_i32, %c0_i32_0 : i32, i32
  }
  func.func @transform_3(%arg0: i32) -> (i32, i32, i32) {
    %c0_i32 = arith.constant 0 : i32
    %c0_i32_0 = arith.constant 0 : i32
    %c0_i32_1 = arith.constant 0 : i32
    return %arg0, %c0_i32, %c0_i32_0 : i32, i32, i32
  }
}

</mosaic_0001>

<llo_original>
// kernel: tpu_custom_call.1
$region0: #{tpu_custom_call.1}
  #allocation0 [shape = 'u32[]', space=smem, size = 0x4, offset = 0x4, fixed_abs, tag = 'smem constant byte address 0x4 - core index']
  #allocation1 [shape = 'u32[144,128]{1,0:T(1,128)}', space=vmem, size = 0x12000, scoped, tag = 'internal scratch']
  %s0 = inlined_call_operand.vmem [shape: bf16[2,512,324], index: 0, kind: input, shape index: {}]
  %s1 = inlined_call_operand.vmem [shape: bf16[9,512], index: 1, kind: input, shape index: {}]
  %s2 = inlined_call_operand.vmem [shape: bf16[286,512], index: 2, kind: input, shape index: {}]
  %s3 = inlined_call_operand.hbm [shape: f32[2,1,128], index: 3, kind: output, shape index: {}]
  %s4 = sld [smem:[#allocation0]]
  $region45: #{tpu_custom_call.1} parent=0
    _
  %s6 = ssub.s32 1, %s4
  %s7 = scalar_select 0, %s6, %s4
  $region1: #{tpu_custom_call.1} parent=0
    #allocation2 [shape = 'u8[1024]{0}', space=vmem, size = 0x400, scoped, tag = 'output window, operand 0']
    #allocation3 [shape = 's32[2]{0}', space=sflag, size = 0x8, scoped, tag = 'scoped memory for tpu_custom_call.1']
    %8 = vsyncpa [#allocation3], 0
    %s9 = scalar_lea.sflag [#allocation3], 1
    %10 = vsyncpa %s9, 0
    loop: start=0, step=1, limit=4
    $region2: #{tpu_custom_call.1} parent=1 // loop_pre_header
      _
    $region3: #{tpu_custom_call.1} parent=1 // loop_header
      %s12 = sphi 0, %s16
      %p13 = scmp.ge.s32.totalorder %s12, 4
      %s22 = sphi 0, %s24
      %s25 = sphi 0, %s22
      %s26 = sphi 0, %s25
      %s42 = sphi 0, %s26
      %s46 = sphi 0, %s46
      %s48 = sphi 0, %s46
      %s49 = sphi 0, %s48
      %s63 = sphi 0, %s49
      %s67 = sphi 0, %s67
      %s69 = sphi 0, %s67
      %s70 = sphi 0, %s69
      %s84 = sphi 0, %s70
      %s90 = sphi 0, %s92
      %s93 = sphi 0, %s90
      %s94 = sphi 0, %s93
      %s110 = sphi 0, %s94
    $region4: #{tpu_custom_call.1} parent=1 // loop_header_branch
      %15 = sbr.rel (%p13) target = $region8
    $region5: #{tpu_custom_call.1} parent=1 // loop_body
      %s17 = ssub.s32 %s12, 1
      %s18 = ssub.s32 %s12, 2
      %s19 = sadd.s32 %s12, 1
      %s20 = ssub.s32 %s12, %s19
      %p21 = scmp.eq.s32.totalorder %s20, 0
      %s23 = sadd.s32 %s22, 1
      %s24 = scalar_select %p21, %s22, %s23
      %p27 = pneg %p21
      %p28 = scmp.eq.s32.totalorder %s12, 1
      %p29 = por %p27, %p28
      %p30 = scmp.ne.s32.totalorder %s22, %s25
      %p31 = scmp.eq.s32.totalorder %s12, 0
      %p32 = por %p30, %p31
      %p33 = scmp.ne.s32.totalorder %s22, %s25
      %p34 = scmp.eq.s32.totalorder %s17, 1
      %p35 = por %p33, %p34
      %p36 = scmp.ne.s32.totalorder %s25, %s26
      %p37 = scmp.eq.s32.totalorder %s17, 0
      %p38 = por %p36, %p37
      %p39 = scmp.ne.s32.totalorder %s25, %s26
      %p40 = scmp.eq.s32.totalorder %s18, 1
      %p41 = por %p39, %p40
      %p43 = scmp.ne.s32.totalorder %s26, %s42
      %p44 = scmp.eq.s32.totalorder %s18, 0
      %p45 = por %p43, %p44
      %s47 = sadd.s32 %s46, 1
      %p50 = scmp.eq.s32.totalorder %s12, 1
      %p51 = scmp.ne.s32.totalorder %s46, %s48
      %p52 = scmp.eq.s32.totalorder %s12, 0
      %p53 = por %p51, %p52
      %p54 = scmp.ne.s32.totalorder %s46, %s48
      %p55 = scmp.eq.s32.totalorder %s17, 1
      %p56 = por %p54, %p55
      %p57 = scmp.ne.s32.totalorder %s48, %s49
      %p58 = scmp.eq.s32.totalorder %s17, 0
      %p59 = por %p57, %p58
      %p60 = scmp.ne.s32.totalorder %s48, %s49
      %p61 = scmp.eq.s32.totalorder %s18, 1
      %p62 = por %p60, %p61
      %p64 = scmp.ne.s32.totalorder %s49, %s63
      %p65 = scmp.eq.s32.totalorder %s18, 0
      %p66 = por %p64, %p65
      %s68 = sadd.s32 %s67, 1
      %p71 = scmp.eq.s32.totalorder %s12, 1
      %p72 = scmp.ne.s32.totalorder %s67, %s69
      %p73 = scmp.eq.s32.totalorder %s12, 0
      %p74 = por %p72, %p73
      %p75 = scmp.ne.s32.totalorder %s67, %s69
      %p76 = scmp.eq.s32.totalorder %s17, 1
      %p77 = por %p75, %p76
      %p78 = scmp.ne.s32.totalorder %s69, %s70
      %p79 = scmp.eq.s32.totalorder %s17, 0
      %p80 = por %p78, %p79
      %p81 = scmp.ne.s32.totalorder %s69, %s70
      %p82 = scmp.eq.s32.totalorder %s18, 1
      %p83 = por %p81, %p82
      %p85 = scmp.ne.s32.totalorder %s70, %s84
      %p86 = scmp.eq.s32.totalorder %s18, 0
      %p87 = por %p85, %p86
      %s88 = ssub.s32 %s12, %s19
      %p89 = scmp.eq.s32.totalorder %s88, 0
      %s91 = sadd.s32 %s90, 1
      %s92 = scalar_select %p89, %s90, %s91
      %p95 = pneg %p89
      %p96 = scmp.eq.s32.totalorder %s12, 1
      %p97 = por %p95, %p96
      %p98 = scmp.ne.s32.totalorder %s90, %s93
      %p99 = scmp.eq.s32.totalorder %s12, 0
      %p100 = por %p98, %p99
      %p101 = scmp.ne.s32.totalorder %s90, %s93
      %p102 = scmp.eq.s32.totalorder %s17, 1
      %p103 = por %p101, %p102
      %p104 = scmp.ne.s32.totalorder %s93, %s94
      %p105 = scmp.eq.s32.totalorder %s17, 0
      %p106 = por %p104, %p105
      %p107 = scmp.ne.s32.totalorder %s93, %s94
      %p108 = scmp.eq.s32.totalorder %s18, 1
      %p109 = por %p107, %p108
      %p111 = scmp.ne.s32.totalorder %s94, %s110
      %p112 = scmp.eq.s32.totalorder %s18, 0
      %p113 = por %p111, %p112
      %p114 = scmp.le.s32.totalorder 1, %s12
      %p115 = scmp.lt.s32.totalorder %s12, 3
      %p116 = pnand %p114, %p115
      %p117 = pneg %p116
      // Predicated region
      $region9: #{tpu_custom_call.1} parent=5 // pred_check
        _
      $region10: #{tpu_custom_call.1} parent=5 // pred_check_branch
        %119 = sbr.rel (%p116) target = $region12
      $region11: #{tpu_custom_call.1} parent=5 // pred_region
        %s120 = ssub.s32 %s12, 1
        // Predicated region
        $region13: #{tpu_custom_call.1} parent=11 // pred_check
          %p121 = pneg %p59
        $region14: #{tpu_custom_call.1} parent=11 // pred_check_branch
          %123 = sbr.rel (%p121) target = $region16
        $region15: #{tpu_custom_call.1} parent=11 // pred_region
          _
        $region16: #{tpu_custom_call.1} parent=11 // pred_fallthru
          _
        // Predicated region
        $region17: #{tpu_custom_call.1} parent=11 // pred_check
          %p124 = pneg %p80
        $region18: #{tpu_custom_call.1} parent=11 // pred_check_branch
          %126 = sbr.rel (%p124) target = $region20
        $region19: #{tpu_custom_call.1} parent=11 // pred_region
          _
        $region20: #{tpu_custom_call.1} parent=11 // pred_fallthru
          _
      $region12: #{tpu_custom_call.1} parent=5 // pred_fallthru
        _
      %p127 = scmp.lt.s32.totalorder %s12, 2
      // Predicated region
      $region21: #{tpu_custom_call.1} parent=5 // pred_check
        %p128 = pneg %p127
      $region22: #{tpu_custom_call.1} parent=5 // pred_check_branch
        %130 = sbr.rel (%p128) target = $region24
      $region23: #{tpu_custom_call.1} parent=5 // pred_region
        // Predicated region
        $region25: #{tpu_custom_call.1} parent=23 // pred_check
          %p131 = pneg %p32
        $region26: #{tpu_custom_call.1} parent=23 // pred_check_branch
          %133 = sbr.rel (%p131) target = $region28
        $region27: #{tpu_custom_call.1} parent=23 // pred_region
          %p134 = scmp.lt.s32.totalorder %s12, 1
          %s135 = scalar_select %p134, %s12, 1
          %s136 = smul.addr %s135, 192
          %s137 = smul.addr %s136, 4
          %s138 = scalar_lea.vmem %s0, %s137
        $region28: #{tpu_custom_call.1} parent=23 // pred_fallthru
          _
      $region24: #{tpu_custom_call.1} parent=5 // pred_fallthru
        _
      %p139 = scmp.le.s32.totalorder 1, %s12
      %p140 = scmp.lt.s32.totalorder %s12, 3
      %p141 = pnand %p139, %p140
      %p142 = pneg %p141
      // Predicated region
      $region29: #{tpu_custom_call.1} parent=5 // pred_check
        _
      $region30: #{tpu_custom_call.1} parent=5 // pred_check_branch
        %144 = sbr.rel (%p141) target = $region32
      $region31: #{tpu_custom_call.1} parent=5 // pred_region
        %s145 = ssub.s32 %s12, 1
        %p146 = scmp.lt.s32.totalorder %s17, 1
        %s147 = scalar_select %p146, %s17, 1
        %s148 = smul.addr %s147, 192
        %s149 = smul.addr %s148, 4
        %s150 = scalar_lea.vmem %s0, %s149
        %p151 = pneg %p38
        %p152 = pneg %p35
        %p153 = pneg %p59
        %p154 = pneg %p56
        %p155 = pneg %p80
        %p156 = pneg %p77
        %p157 = pneg %p106
        %p158 = pneg %p103
        %s159 = sand.u32 %s93, 1
        %s160 = scalar_lea.sflag [#allocation3], %s159
        %s161 = sand.u32 %s93, 1
        %s162 = scalar_lea.vmem [#allocation2], %s161
        %p163 = scmp.lt.s32.totalorder %s17, 1
        %s164 = scalar_select %p163, %s17, 1
        %s165 = smul.addr %s164, 192
        %s166 = smul.addr %s165, 4
        %s167 = scalar_lea.vmem %s0, %s166
        %v169 = vld [vmem:[%s167] sm:$0xff]
        %v170 = vld [vmem:[%s167 + $0x8] sm:$0xf]
        %v171 = vld [vmem:[%s167 + $0xc] sm:$0xff]
        %v172 = vld [vmem:[%s167 + $0x14] sm:$0xf]
        %v173 = vld [vmem:[%s167 + $0x18] sm:$0xff]
        %v174 = vld [vmem:[%s167 + $0x20] sm:$0xf]
        %v175 = vld [vmem:[%s167 + $0x24] sm:$0xff]
        %v176 = vld [vmem:[%s167 + $0x2c] sm:$0xf]
        %v177 = vld [vmem:[%s167 + $0x30] sm:$0xff]
        %v178 = vld [vmem:[%s167 + $0x38] sm:$0xf]
        %v179 = vld [vmem:[%s167 + $0x3c] sm:$0xff]
        %v180 = vld [vmem:[%s167 + $0x44] sm:$0xf]
        %v181 = vld [vmem:[%s167 + $0x48] sm:$0xff]
        %v182 = vld [vmem:[%s167 + $0x50] sm:$0xf]
        %v183 = vld [vmem:[%s167 + $0x54] sm:$0xff]
        %v184 = vld [vmem:[%s167 + $0x5c] sm:$0xf]
        %v185 = vld [vmem:[%s167 + $0x60] sm:$0xff]
        %v186 = vld [vmem:[%s167 + $0x68] sm:$0xf]
        %v187 = vld [vmem:[%s167 + $0x6c] sm:$0xff]
        %v188 = vld [vmem:[%s167 + $0x74] sm:$0xf]
        %v189 = vld [vmem:[%s167 + $0x78] sm:$0xff]
        %v190 = vld [vmem:[%s167 + $0x80] sm:$0xf]
        %v191 = vld [vmem:[%s167 + $0x84] sm:$0xff]
        %v192 = vld [vmem:[%s167 + $0x8c] sm:$0xf]
        %v193 = vld [vmem:[%s167 + $0x90] sm:$0xff]
        %v194 = vld [vmem:[%s167 + $0x98] sm:$0xf]
        %v195 = vld [vmem:[%s167 + $0x9c] sm:$0xff]
        %v196 = vld [vmem:[%s167 + $0xa4] sm:$0xf]
        %v197 = vld [vmem:[%s167 + $0xa8] sm:$0xff]
        %v198 = vld [vmem:[%s167 + $0xb0] sm:$0xf]
        %v199 = vld [vmem:[%s167 + $0xb4] sm:$0xff]
        %v200 = vld [vmem:[%s167 + $0xbc] sm:$0xf]
        %v201 = vld [vmem:[%s167 + $0xc0] sm:$0xff]
        %v202 = vld [vmem:[%s167 + $0xc8] sm:$0xf]
        %v203 = vld [vmem:[%s167 + $0xcc] sm:$0xff]
        %v204 = vld [vmem:[%s167 + $0xd4] sm:$0xf]
        %v205 = vld [vmem:[%s167 + $0xd8] sm:$0xff]
        %v206 = vld [vmem:[%s167 + $0xe0] sm:$0xf]
        %v207 = vld [vmem:[%s167 + $0xe4] sm:$0xff]
        %v208 = vld [vmem:[%s167 + $0xec] sm:$0xf]
        %v209 = vld [vmem:[%s167 + $0xf0] sm:$0xff]
        %v210 = vld [vmem:[%s167 + $0xf8] sm:$0xf]
        %v211 = vld [vmem:[%s167 + $0xfc] sm:$0xff]
        %v212 = vld [vmem:[%s167 + $0x104] sm:$0xf]
        %v213 = vld [vmem:[%s167 + $0x108] sm:$0xff]
        %v214 = vld [vmem:[%s167 + $0x110] sm:$0xf]
        %v215 = vld [vmem:[%s167 + $0x114] sm:$0xff]
        %v216 = vld [vmem:[%s167 + $0x11c] sm:$0xf]
        %v217 = vld [vmem:[%s167 + $0x120] sm:$0xff]
        %v218 = vld [vmem:[%s167 + $0x128] sm:$0xf]
        %v219 = vld [vmem:[%s167 + $0x12c] sm:$0xff]
        %v220 = vld [vmem:[%s167 + $0x134] sm:$0xf]
        %v221 = vld [vmem:[%s167 + $0x138] sm:$0xff]
        %v222 = vld [vmem:[%s167 + $0x140] sm:$0xf]
        %v223 = vld [vmem:[%s167 + $0x144] sm:$0xff]
        %v224 = vld [vmem:[%s167 + $0x14c] sm:$0xf]
        %v225 = vld [vmem:[%s167 + $0x150] sm:$0xff]
        %v226 = vld [vmem:[%s167 + $0x158] sm:$0xf]
        %v227 = vld [vmem:[%s167 + $0x15c] sm:$0xff]
        %v228 = vld [vmem:[%s167 + $0x164] sm:$0xf]
        %v229 = vld [vmem:[%s167 + $0x168] sm:$0xff]
        %v230 = vld [vmem:[%s167 + $0x170] sm:$0xf]
        %v231 = vld [vmem:[%s167 + $0x174] sm:$0xff]
        %v232 = vld [vmem:[%s167 + $0x17c] sm:$0xf]
        %v233 = vld [vmem:[%s167 + $0x180] sm:$0xff]
        %v234 = vld [vmem:[%s167 + $0x188] sm:$0xf]
        %v235 = vld [vmem:[%s167 + $0x18c] sm:$0xff]
        %v236 = vld [vmem:[%s167 + $0x194] sm:$0xf]
        %v237 = vld [vmem:[%s167 + $0x198] sm:$0xff]
        %v238 = vld [vmem:[%s167 + $0x1a0] sm:$0xf]
        %v239 = vld [vmem:[%s167 + $0x1a4] sm:$0xff]
        %v240 = vld [vmem:[%s167 + $0x1ac] sm:$0xf]
        %v241 = vld [vmem:[%s167 + $0x1b0] sm:$0xff]
        %v242 = vld [vmem:[%s167 + $0x1b8] sm:$0xf]
        %v243 = vld [vmem:[%s167 + $0x1bc] sm:$0xff]
        %v244 = vld [vmem:[%s167 + $0x1c4] sm:$0xf]
        %v245 = vld [vmem:[%s167 + $0x1c8] sm:$0xff]
        %v246 = vld [vmem:[%s167 + $0x1d0] sm:$0xf]
        %v247 = vld [vmem:[%s167 + $0x1d4] sm:$0xff]
        %v248 = vld [vmem:[%s167 + $0x1dc] sm:$0xf]
        %v249 = vld [vmem:[%s167 + $0x1e0] sm:$0xff]
        %v250 = vld [vmem:[%s167 + $0x1e8] sm:$0xf]
        %v251 = vld [vmem:[%s167 + $0x1ec] sm:$0xff]
        %v252 = vld [vmem:[%s167 + $0x1f4] sm:$0xf]
        %v253 = vld [vmem:[%s167 + $0x1f8] sm:$0xff]
        %v254 = vld [vmem:[%s167 + $0x200] sm:$0xf]
        %v255 = vld [vmem:[%s167 + $0x204] sm:$0xff]
        %v256 = vld [vmem:[%s167 + $0x20c] sm:$0xf]
        %v257 = vld [vmem:[%s167 + $0x210] sm:$0xff]
        %v258 = vld [vmem:[%s167 + $0x218] sm:$0xf]
        %v259 = vld [vmem:[%s167 + $0x21c] sm:$0xff]
        %v260 = vld [vmem:[%s167 + $0x224] sm:$0xf]
        %v261 = vld [vmem:[%s167 + $0x228] sm:$0xff]
        %v262 = vld [vmem:[%s167 + $0x230] sm:$0xf]
        %v263 = vld [vmem:[%s167 + $0x234] sm:$0xff]
        %v264 = vld [vmem:[%s167 + $0x23c] sm:$0xf]
        %v265 = vld [vmem:[%s167 + $0x240] sm:$0xff]
        %v266 = vld [vmem:[%s167 + $0x248] sm:$0xf]
        %v267 = vld [vmem:[%s167 + $0x24c] sm:$0xff]
        %v268 = vld [vmem:[%s167 + $0x254] sm:$0xf]
        %v269 = vld [vmem:[%s167 + $0x258] sm:$0xff]
        %v270 = vld [vmem:[%s167 + $0x260] sm:$0xf]
        %v271 = vld [vmem:[%s167 + $0x264] sm:$0xff]
        %v272 = vld [vmem:[%s167 + $0x26c] sm:$0xf]
        %v273 = vld [vmem:[%s167 + $0x270] sm:$0xff]
        %v274 = vld [vmem:[%s167 + $0x278] sm:$0xf]
        %v275 = vld [vmem:[%s167 + $0x27c] sm:$0xff]
        %v276 = vld [vmem:[%s167 + $0x284] sm:$0xf]
        %v277 = vld [vmem:[%s167 + $0x288] sm:$0xff]
        %v278 = vld [vmem:[%s167 + $0x290] sm:$0xf]
        %v279 = vld [vmem:[%s167 + $0x294] sm:$0xff]
        %v280 = vld [vmem:[%s167 + $0x29c] sm:$0xf]
        %v281 = vld [vmem:[%s167 + $0x2a0] sm:$0xff]
        %v282 = vld [vmem:[%s167 + $0x2a8] sm:$0xf]
        %v283 = vld [vmem:[%s167 + $0x2ac] sm:$0xff]
        %v284 = vld [vmem:[%s167 + $0x2b4] sm:$0xf]
        %v285 = vld [vmem:[%s167 + $0x2b8] sm:$0xff]
        %v286 = vld [vmem:[%s167 + $0x2c0] sm:$0xf]
        %v287 = vld [vmem:[%s167 + $0x2c4] sm:$0xff]
        %v288 = vld [vmem:[%s167 + $0x2cc] sm:$0xf]
        %v289 = vld [vmem:[%s167 + $0x2d0] sm:$0xff]
        %v290 = vld [vmem:[%s167 + $0x2d8] sm:$0xf]
        %v291 = vld [vmem:[%s167 + $0x2dc] sm:$0xff]
        %v292 = vld [vmem:[%s167 + $0x2e4] sm:$0xf]
        %v293 = vld [vmem:[%s167 + $0x2e8] sm:$0xff]
        %v294 = vld [vmem:[%s167 + $0x2f0] sm:$0xf]
        %v295 = vld [vmem:[%s167 + $0x2f4] sm:$0xff]
        %v296 = vld [vmem:[%s167 + $0x2fc] sm:$0xf]
        %v297 = vld [vmem:[%s1] sm:$0xff]
        %v298 = vld [vmem:[%s1 + $0x8] sm:$0xff]
        %v299 = vld [vmem:[%s1 + $0x10] sm:$0x11]
        %v300 = vld [vmem:[%s1 + $0x18] sm:$0x11]
        %v305 = vunpack.c.l.b16 %v297
        %v306 = vunpack.c.h.b16 %v297
        %v307 = vunpack.c.l.b16 %v298
        %v308 = vunpack.c.h.b16 %v298
        %v309 = vunpack.c.l.b16 %v299
        %v310 = vunpack.c.h.b16 %v299
        %v311 = vunpack.c.l.b16 %v300
        %v312 = vunpack.c.h.b16 %v300
        %v313 = vpack.c.b16 %v309, %v305
        %v314 = vpack.c.b16 %v310, %v306
        %v315 = vpack.c.b16 %v311, %v307
        %v316 = vpack.c.b16 %v312, %v308
        %v449 = vunpack.c.l.b16 %v169
        %v450 = vunpack.c.h.b16 %v169
        %v451 = vunpack.c.l.b16 %v170
        %v452 = vunpack.c.l.b16 %v171
        %v453 = vunpack.c.h.b16 %v171
        %v454 = vunpack.c.l.b16 %v172
        %v455 = vunpack.c.l.b16 %v173
        %v456 = vunpack.c.h.b16 %v173
        %v457 = vunpack.c.l.b16 %v174
        %v458 = vunpack.c.l.b16 %v175
        %v459 = vunpack.c.h.b16 %v175
        %v460 = vunpack.c.l.b16 %v176
        %v461 = vunpack.c.l.b16 %v177
        %v462 = vunpack.c.h.b16 %v177
        %v463 = vunpack.c.l.b16 %v178
        %v464 = vunpack.c.l.b16 %v179
        %v465 = vunpack.c.h.b16 %v179
        %v466 = vunpack.c.l.b16 %v180
        %v467 = vunpack.c.l.b16 %v181
        %v468 = vunpack.c.h.b16 %v181
        %v469 = vunpack.c.l.b16 %v182
        %v470 = vunpack.c.l.b16 %v183
        %v471 = vunpack.c.h.b16 %v183
        %v472 = vunpack.c.l.b16 %v184
        %v473 = vunpack.c.l.b16 %v185
        %v474 = vunpack.c.h.b16 %v185
        %v475 = vunpack.c.l.b16 %v186
        %v476 = vunpack.c.l.b16 %v187
        %v477 = vunpack.c.h.b16 %v187
        %v478 = vunpack.c.l.b16 %v188
        %v479 = vunpack.c.l.b16 %v189
        %v480 = vunpack.c.h.b16 %v189
        %v481 = vunpack.c.l.b16 %v190
        %v482 = vunpack.c.l.b16 %v191
        %v483 = vunpack.c.h.b16 %v191
        %v484 = vunpack.c.l.b16 %v192
        %v485 = vunpack.c.l.b16 %v193
        %v486 = vunpack.c.h.b16 %v193
        %v487 = vunpack.c.l.b16 %v194
        %v488 = vunpack.c.l.b16 %v195
        %v489 = vunpack.c.h.b16 %v195
        %v490 = vunpack.c.l.b16 %v196
        %v491 = vunpack.c.l.b16 %v197
        %v492 = vunpack.c.h.b16 %v197
        %v493 = vunpack.c.l.b16 %v198
        %v494 = vunpack.c.l.b16 %v199
        %v495 = vunpack.c.h.b16 %v199
        %v496 = vunpack.c.l.b16 %v200
        %v497 = vunpack.c.l.b16 %v201
        %v498 = vunpack.c.h.b16 %v201
        %v499 = vunpack.c.l.b16 %v202
        %v500 = vunpack.c.l.b16 %v203
        %v501 = vunpack.c.h.b16 %v203
        %v502 = vunpack.c.l.b16 %v204
        %v503 = vunpack.c.l.b16 %v205
        %v504 = vunpack.c.h.b16 %v205
        %v505 = vunpack.c.l.b16 %v206
        %v506 = vunpack.c.l.b16 %v207
        %v507 = vunpack.c.h.b16 %v207
        %v508 = vunpack.c.l.b16 %v208
        %v509 = vunpack.c.l.b16 %v209
        %v510 = vunpack.c.h.b16 %v209
        %v511 = vunpack.c.l.b16 %v210
        %v512 = vunpack.c.l.b16 %v211
        %v513 = vunpack.c.h.b16 %v211
        %v514 = vunpack.c.l.b16 %v212
        %v515 = vunpack.c.l.b16 %v213
        %v516 = vunpack.c.h.b16 %v213
        %v517 = vunpack.c.l.b16 %v214
        %v518 = vunpack.c.l.b16 %v215
        %v519 = vunpack.c.h.b16 %v215
        %v520 = vunpack.c.l.b16 %v216
        %v521 = vunpack.c.l.b16 %v217
        %v522 = vunpack.c.h.b16 %v217
        %v523 = vunpack.c.l.b16 %v218
        %v524 = vunpack.c.l.b16 %v219
        %v525 = vunpack.c.h.b16 %v219
        %v526 = vunpack.c.l.b16 %v220
        %v527 = vunpack.c.l.b16 %v221
        %v528 = vunpack.c.h.b16 %v221
        %v529 = vunpack.c.l.b16 %v222
        %v530 = vunpack.c.l.b16 %v223
        %v531 = vunpack.c.h.b16 %v223
        %v532 = vunpack.c.l.b16 %v224
        %v533 = vunpack.c.l.b16 %v225
        %v534 = vunpack.c.h.b16 %v225
        %v535 = vunpack.c.l.b16 %v226
        %v536 = vunpack.c.l.b16 %v227
        %v537 = vunpack.c.h.b16 %v227
        %v538 = vunpack.c.l.b16 %v228
        %v539 = vunpack.c.l.b16 %v229
        %v540 = vunpack.c.h.b16 %v229
        %v541 = vunpack.c.l.b16 %v230
        %v542 = vunpack.c.l.b16 %v231
        %v543 = vunpack.c.h.b16 %v231
        %v544 = vunpack.c.l.b16 %v232
        %v545 = vunpack.c.l.b16 %v233
        %v546 = vunpack.c.h.b16 %v233
        %v547 = vunpack.c.l.b16 %v234
        %v548 = vunpack.c.l.b16 %v235
        %v549 = vunpack.c.h.b16 %v235
        %v550 = vunpack.c.l.b16 %v236
        %v551 = vunpack.c.l.b16 %v237
        %v552 = vunpack.c.h.b16 %v237
        %v553 = vunpack.c.l.b16 %v238
        %v554 = vunpack.c.l.b16 %v239
        %v555 = vunpack.c.h.b16 %v239
        %v556 = vunpack.c.l.b16 %v240
        %v557 = vunpack.c.l.b16 %v241
        %v558 = vunpack.c.h.b16 %v241
        %v559 = vunpack.c.l.b16 %v242
        %v560 = vunpack.c.l.b16 %v243
        %v561 = vunpack.c.h.b16 %v243
        %v562 = vunpack.c.l.b16 %v244
        %v563 = vunpack.c.l.b16 %v245
        %v564 = vunpack.c.h.b16 %v245
        %v565 = vunpack.c.l.b16 %v246
        %v566 = vunpack.c.l.b16 %v247
        %v567 = vunpack.c.h.b16 %v247
        %v568 = vunpack.c.l.b16 %v248
        %v569 = vunpack.c.l.b16 %v249
        %v570 = vunpack.c.h.b16 %v249
        %v571 = vunpack.c.l.b16 %v250
        %v572 = vunpack.c.l.b16 %v251
        %v573 = vunpack.c.h.b16 %v251
        %v574 = vunpack.c.l.b16 %v252
        %v575 = vunpack.c.l.b16 %v253
        %v576 = vunpack.c.h.b16 %v253
        %v577 = vunpack.c.l.b16 %v254
        %v578 = vunpack.c.l.b16 %v255
        %v579 = vunpack.c.h.b16 %v255
        %v580 = vunpack.c.l.b16 %v256
        %v581 = vunpack.c.l.b16 %v257
        %v582 = vunpack.c.h.b16 %v257
        %v583 = vunpack.c.l.b16 %v258
        %v584 = vunpack.c.l.b16 %v259
        %v585 = vunpack.c.h.b16 %v259
        %v586 = vunpack.c.l.b16 %v260
        %v587 = vunpack.c.l.b16 %v261
        %v588 = vunpack.c.h.b16 %v261
        %v589 = vunpack.c.l.b16 %v262
        %v590 = vunpack.c.l.b16 %v263
        %v591 = vunpack.c.h.b16 %v263
        %v592 = vunpack.c.l.b16 %v264
        %v593 = vunpack.c.l.b16 %v265
        %v594 = vunpack.c.h.b16 %v265
        %v595 = vunpack.c.l.b16 %v266
        %v596 = vunpack.c.l.b16 %v267
        %v597 = vunpack.c.h.b16 %v267
        %v598 = vunpack.c.l.b16 %v268
        %v599 = vunpack.c.l.b16 %v269
        %v600 = vunpack.c.h.b16 %v269
        %v601 = vunpack.c.l.b16 %v270
        %v602 = vunpack.c.l.b16 %v271
        %v603 = vunpack.c.h.b16 %v271
        %v604 = vunpack.c.l.b16 %v272
        %v605 = vunpack.c.l.b16 %v273
        %v606 = vunpack.c.h.b16 %v273
        %v607 = vunpack.c.l.b16 %v274
        %v608 = vunpack.c.l.b16 %v275
        %v609 = vunpack.c.h.b16 %v275
        %v610 = vunpack.c.l.b16 %v276
        %v611 = vunpack.c.l.b16 %v277
        %v612 = vunpack.c.h.b16 %v277
        %v613 = vunpack.c.l.b16 %v278
        %v614 = vunpack.c.l.b16 %v279
        %v615 = vunpack.c.h.b16 %v279
        %v616 = vunpack.c.l.b16 %v280
        %v617 = vunpack.c.l.b16 %v281
        %v618 = vunpack.c.h.b16 %v281
        %v619 = vunpack.c.l.b16 %v282
        %v620 = vunpack.c.l.b16 %v283
        %v621 = vunpack.c.h.b16 %v283
        %v622 = vunpack.c.l.b16 %v284
        %v623 = vunpack.c.l.b16 %v285
        %v624 = vunpack.c.h.b16 %v285
        %v625 = vunpack.c.l.b16 %v286
        %v626 = vunpack.c.l.b16 %v287
        %v627 = vunpack.c.h.b16 %v287
        %v628 = vunpack.c.l.b16 %v288
        %v629 = vunpack.c.l.b16 %v289
        %v630 = vunpack.c.h.b16 %v289
        %v631 = vunpack.c.l.b16 %v290
        %v632 = vunpack.c.l.b16 %v291
        %v633 = vunpack.c.h.b16 %v291
        %v634 = vunpack.c.l.b16 %v292
        %v635 = vunpack.c.l.b16 %v293
        %v636 = vunpack.c.h.b16 %v293
        %v637 = vunpack.c.l.b16 %v294
        %v638 = vunpack.c.l.b16 %v295
        %v639 = vunpack.c.h.b16 %v295
        %v640 = vunpack.c.l.b16 %v296
        %v641 = vpack.c.b16 %v452, %v449
        %v642 = vpack.c.b16 %v453, %v450
        %v643 = vpack.c.b16 %v454, %v451
        %v644 = vpack.c.b16 %v458, %v455
        %v645 = vpack.c.b16 %v459, %v456
        %v646 = vpack.c.b16 %v460, %v457
        %v647 = vpack.c.b16 %v464, %v461
        %v648 = vpack.c.b16 %v465, %v462
        %v649 = vpack.c.b16 %v466, %v463
        %v650 = vpack.c.b16 %v470, %v467
        %v651 = vpack.c.b16 %v471, %v468
        %v652 = vpack.c.b16 %v472, %v469
        %v653 = vpack.c.b16 %v476, %v473
        %v654 = vpack.c.b16 %v477, %v474
        %v655 = vpack.c.b16 %v478, %v475
        %v656 = vpack.c.b16 %v482, %v479
        %v657 = vpack.c.b16 %v483, %v480
        %v658 = vpack.c.b16 %v484, %v481
        %v659 = vpack.c.b16 %v488, %v485
        %v660 = vpack.c.b16 %v489, %v486
        %v661 = vpack.c.b16 %v490, %v487
        %v662 = vpack.c.b16 %v494, %v491
        %v663 = vpack.c.b16 %v495, %v492
        %v664 = vpack.c.b16 %v496, %v493
        %v665 = vpack.c.b16 %v500, %v497
        %v666 = vpack.c.b16 %v501, %v498
        %v667 = vpack.c.b16 %v502, %v499
        %v668 = vpack.c.b16 %v506, %v503
        %v669 = vpack.c.b16 %v507, %v504
        %v670 = vpack.c.b16 %v508, %v505
        %v671 = vpack.c.b16 %v512, %v509
        %v672 = vpack.c.b16 %v513, %v510
        %v673 = vpack.c.b16 %v514, %v511
        %v674 = vpack.c.b16 %v518, %v515
        %v675 = vpack.c.b16 %v519, %v516
        %v676 = vpack.c.b16 %v520, %v517
        %v677 = vpack.c.b16 %v524, %v521
        %v678 = vpack.c.b16 %v525, %v522
        %v679 = vpack.c.b16 %v526, %v523
        %v680 = vpack.c.b16 %v530, %v527
        %v681 = vpack.c.b16 %v531, %v528
        %v682 = vpack.c.b16 %v532, %v529
        %v683 = vpack.c.b16 %v536, %v533
        %v684 = vpack.c.b16 %v537, %v534
        %v685 = vpack.c.b16 %v538, %v535
        %v686 = vpack.c.b16 %v542, %v539
        %v687 = vpack.c.b16 %v543, %v540
        %v688 = vpack.c.b16 %v544, %v541
        %v689 = vpack.c.b16 %v548, %v545
        %v690 = vpack.c.b16 %v549, %v546
        %v691 = vpack.c.b16 %v550, %v547
        %v692 = vpack.c.b16 %v554, %v551
        %v693 = vpack.c.b16 %v555, %v552
        %v694 = vpack.c.b16 %v556, %v553
        %v695 = vpack.c.b16 %v560, %v557
        %v696 = vpack.c.b16 %v561, %v558
        %v697 = vpack.c.b16 %v562, %v559
        %v698 = vpack.c.b16 %v566, %v563
        %v699 = vpack.c.b16 %v567, %v564
        %v700 = vpack.c.b16 %v568, %v565
        %v701 = vpack.c.b16 %v572, %v569
        %v702 = vpack.c.b16 %v573, %v570
        %v703 = vpack.c.b16 %v574, %v571
        %v704 = vpack.c.b16 %v578, %v575
        %v705 = vpack.c.b16 %v579, %v576
        %v706 = vpack.c.b16 %v580, %v577
        %v707 = vpack.c.b16 %v584, %v581
        %v708 = vpack.c.b16 %v585, %v582
        %v709 = vpack.c.b16 %v586, %v583
        %v710 = vpack.c.b16 %v590, %v587
        %v711 = vpack.c.b16 %v591, %v588
        %v712 = vpack.c.b16 %v592, %v589
        %v713 = vpack.c.b16 %v596, %v593
        %v714 = vpack.c.b16 %v597, %v594
        %v715 = vpack.c.b16 %v598, %v595
        %v716 = vpack.c.b16 %v602, %v599
        %v717 = vpack.c.b16 %v603, %v600
        %v718 = vpack.c.b16 %v604, %v601
        %v719 = vpack.c.b16 %v608, %v605
        %v720 = vpack.c.b16 %v609, %v606
        %v721 = vpack.c.b16 %v610, %v607
        %v722 = vpack.c.b16 %v614, %v611
        %v723 = vpack.c.b16 %v615, %v612
        %v724 = vpack.c.b16 %v616, %v613
        %v725 = vpack.c.b16 %v620, %v617
        %v726 = vpack.c.b16 %v621, %v618
        %v727 = vpack.c.b16 %v622, %v619
        %v728 = vpack.c.b16 %v626, %v623
        %v729 = vpack.c.b16 %v627, %v624
        %v730 = vpack.c.b16 %v628, %v625
        %v731 = vpack.c.b16 %v632, %v629
        %v732 = vpack.c.b16 %v633, %v630
        %v733 = vpack.c.b16 %v634, %v631
        %v734 = vpack.c.b16 %v638, %v635
        %v735 = vpack.c.b16 %v639, %v636
        %v736 = vpack.c.b16 %v640, %v637
        %833 = vmatprep.subr.bf16.mxu0 %v663
        %834 = vmatpush1.bf16.msra.mxu0 %v662
        %835 = vmatprep.subr.bf16.mxu0 %v660
        %836 = vmatpush1.bf16.msra.mxu0 %v659
        %837 = vmatprep.subr.bf16.mxu0 %v657
        %838 = vmatpush1.bf16.msra.mxu0 %v656
        %839 = vmatprep.subr.bf16.mxu0 %v654
        %840 = vmatpush1.bf16.msra.mxu0 %v653
        %841 = vmatprep.subr.bf16.mxu0 %v651
        %842 = vmatpush1.bf16.msra.mxu0 %v650
        %843 = vmatprep.subr.bf16.mxu0 %v648
        %844 = vmatpush1.bf16.msra.mxu0 %v647
        %845 = vmatprep.subr.bf16.mxu0 %v645
        %846 = vmatpush1.bf16.msra.mxu0 %v644
        %847 = vmatprep.subr.bf16.mxu0 %v642
        %848 = vmatpush1.bf16.msra.mxu0 %v641
        %849 = vmatprep.subr.bf16.mxu0 %v687
        %850 = vmatpush2.bf16.msra.mxu0 %v686
        %851 = vmatprep.subr.bf16.mxu0 %v684
        %852 = vmatpush2.bf16.msra.mxu0 %v683
        %853 = vmatprep.subr.bf16.mxu0 %v681
        %854 = vmatpush2.bf16.msra.mxu0 %v680
        %855 = vmatprep.subr.bf16.mxu0 %v678
        %856 = vmatpush2.bf16.msra.mxu0 %v677
        %857 = vmatprep.subr.bf16.mxu0 %v675
        %858 = vmatpush2.bf16.msra.mxu0 %v674
        %859 = vmatprep.subr.bf16.mxu0 %v672
        %860 = vmatpush2.bf16.msra.mxu0 %v671
        %861 = vmatprep.subr.bf16.mxu0 %v669
        %862 = vmatpush2.bf16.msra.mxu0 %v668
        %863 = vmatprep.subr.bf16.mxu0 %v666
        %864 = vmatpush2.bf16.msra.mxu0 %v665
        %865 = vmatprep.mubr.bf16.mxu0 %v314
        %866 = vmatmul.mubr.bf16.gmra.mxu0 %v313
        %v867 = vpop.f32.mrf.mxu0
        %v868 = vadd.f32 0.0, %v867
        %v869 = vpop.f32.mrf.mxu0
        %v870 = vadd.f32 0.0, %v869
        %v871 = vpop.f32.mrf.mxu0
        %v872 = vadd.f32 0.0, %v871
        %v873 = vpop.f32.mrf.mxu0
        %v874 = vadd.f32 0.0, %v873
        %875 = vdwg.mxu0
        %876 = vmatprep.subr.bf16.mxu0 %v711
        %877 = vmatpush1.bf16.msra.mxu0 %v710
        %878 = vmatprep.subr.bf16.mxu0 %v708
        %879 = vmatpush1.bf16.msra.mxu0 %v707
        %880 = vmatprep.subr.bf16.mxu0 %v705
        %881 = vmatpush1.bf16.msra.mxu0 %v704
        %882 = vmatprep.subr.bf16.mxu0 %v702
        %883 = vmatpush1.bf16.msra.mxu0 %v701
        %884 = vmatprep.subr.bf16.mxu0 %v699
        %885 = vmatpush1.bf16.msra.mxu0 %v698
        %886 = vmatprep.subr.bf16.mxu0 %v696
        %887 = vmatpush1.bf16.msra.mxu0 %v695
        %888 = vmatprep.subr.bf16.mxu0 %v693
        %889 = vmatpush1.bf16.msra.mxu0 %v692
        %890 = vmatprep.subr.bf16.mxu0 %v690
        %891 = vmatpush1.bf16.msra.mxu0 %v689
        %892 = vmatprep.subr.bf16.mxu0 %v735
        %893 = vmatpush2.bf16.msra.mxu0 %v734
        %894 = vmatprep.subr.bf16.mxu0 %v732
        %895 = vmatpush2.bf16.msra.mxu0 %v731
        %896 = vmatprep.subr.bf16.mxu0 %v729
        %897 = vmatpush2.bf16.msra.mxu0 %v728
        %898 = vmatprep.subr.bf16.mxu0 %v726
        %899 = vmatpush2.bf16.msra.mxu0 %v725
        %900 = vmatprep.subr.bf16.mxu0 %v723
        %901 = vmatpush2.bf16.msra.mxu0 %v722
        %902 = vmatprep.subr.bf16.mxu0 %v720
        %903 = vmatpush2.bf16.msra.mxu0 %v719
        %904 = vmatprep.subr.bf16.mxu0 %v717
        %905 = vmatpush2.bf16.msra.mxu0 %v716
        %906 = vmatprep.subr.bf16.mxu0 %v714
        %907 = vmatpush2.bf16.msra.mxu0 %v713
        %908 = vmatprep.mubr.bf16.mxu0 %v316
        %909 = vmatmul.mubr.bf16.gmra.mxu0 %v315
        %v910 = vpop.f32.mrf.mxu0
        %v911 = vadd.f32 %v868, %v910
        %v912 = vpop.f32.mrf.mxu0
        %v913 = vadd.f32 %v870, %v912
        %v914 = vpop.f32.mrf.mxu0
        %v915 = vadd.f32 %v872, %v914
        %v916 = vpop.f32.mrf.mxu0
        %v917 = vadd.f32 %v874, %v916
        %918 = vdwg.mxu0
        %919 = vmatprep.subr.bf16.mxu0 0
        %920 = vmatpush1.bf16.msra.mxu0 %v664
        %921 = vmatprep.subr.bf16.mxu0 0
        %922 = vmatpush1.bf16.msra.mxu0 %v661
        %923 = vmatprep.subr.bf16.mxu0 0
        %924 = vmatpush1.bf16.msra.mxu0 %v658
        %925 = vmatprep.subr.bf16.mxu0 0
        %926 = vmatpush1.bf16.msra.mxu0 %v655
        %927 = vmatprep.subr.bf16.mxu0 0
        %928 = vmatpush1.bf16.msra.mxu0 %v652
        %929 = vmatprep.subr.bf16.mxu0 0
        %930 = vmatpush1.bf16.msra.mxu0 %v649
        %931 = vmatprep.subr.bf16.mxu0 0
        %932 = vmatpush1.bf16.msra.mxu0 %v646
        %933 = vmatprep.subr.bf16.mxu0 0
        %934 = vmatpush1.bf16.msra.mxu0 %v643
        %935 = vmatprep.subr.bf16.mxu0 0
        %936 = vmatpush2.bf16.msra.mxu0 %v688
        %937 = vmatprep.subr.bf16.mxu0 0
        %938 = vmatpush2.bf16.msra.mxu0 %v685
        %939 = vmatprep.subr.bf16.mxu0 0
        %940 = vmatpush2.bf16.msra.mxu0 %v682
        %941 = vmatprep.subr.bf16.mxu0 0
        %942 = vmatpush2.bf16.msra.mxu0 %v679
        %943 = vmatprep.subr.bf16.mxu0 0
        %944 = vmatpush2.bf16.msra.mxu0 %v676
        %945 = vmatprep.subr.bf16.mxu0 0
        %946 = vmatpush2.bf16.msra.mxu0 %v673
        %947 = vmatprep.subr.bf16.mxu0 0
        %948 = vmatpush2.bf16.msra.mxu0 %v670
        %949 = vmatprep.subr.bf16.mxu0 0
        %950 = vmatpush2.bf16.msra.mxu0 %v667
        %951 = vmatprep.mubr.bf16.mxu0 %v314
        %952 = vmatmul.mubr.bf16.gmra.mxu0 %v313
        %v953 = vpop.f32.mrf.mxu0
        %v954 = vadd.f32 0.0, %v953
        %v955 = vpop.f32.mrf.mxu0
        %v956 = vpop.f32.mrf.mxu0
        %v957 = vadd.f32 0.0, %v956
        %v958 = vpop.f32.mrf.mxu0
        %959 = vdwg.mxu0
        %960 = vmatprep.subr.bf16.mxu0 0
        %961 = vmatpush1.bf16.msra.mxu0 %v712
        %962 = vmatprep.subr.bf16.mxu0 0
        %963 = vmatpush1.bf16.msra.mxu0 %v709
        %964 = vmatprep.subr.bf16.mxu0 0
        %965 = vmatpush1.bf16.msra.mxu0 %v706
        %966 = vmatprep.subr.bf16.mxu0 0
        %967 = vmatpush1.bf16.msra.mxu0 %v703
        %968 = vmatprep.subr.bf16.mxu0 0
        %969 = vmatpush1.bf16.msra.mxu0 %v700
        %970 = vmatprep.subr.bf16.mxu0 0
        %971 = vmatpush1.bf16.msra.mxu0 %v697
        %972 = vmatprep.subr.bf16.mxu0 0
        %973 = vmatpush1.bf16.msra.mxu0 %v694
        %974 = vmatprep.subr.bf16.mxu0 0
        %975 = vmatpush1.bf16.msra.mxu0 %v691
        %976 = vmatprep.subr.bf16.mxu0 0
        %977 = vmatpush2.bf16.msra.mxu0 %v736
        %978 = vmatprep.subr.bf16.mxu0 0
        %979 = vmatpush2.bf16.msra.mxu0 %v733
        %980 = vmatprep.subr.bf16.mxu0 0
        %981 = vmatpush2.bf16.msra.mxu0 %v730
        %982 = vmatprep.subr.bf16.mxu0 0
        %983 = vmatpush2.bf16.msra.mxu0 %v727
        %984 = vmatprep.subr.bf16.mxu0 0
        %985 = vmatpush2.bf16.msra.mxu0 %v724
        %986 = vmatprep.subr.bf16.mxu0 0
        %987 = vmatpush2.bf16.msra.mxu0 %v721
        %988 = vmatprep.subr.bf16.mxu0 0
        %989 = vmatpush2.bf16.msra.mxu0 %v718
        %990 = vmatprep.subr.bf16.mxu0 0
        %991 = vmatpush2.bf16.msra.mxu0 %v715
        %992 = vmatprep.mubr.bf16.mxu0 %v316
        %993 = vmatmul.mubr.bf16.gmra.mxu0 %v315
        %v994 = vpop.f32.mrf.mxu0
        %v995 = vadd.f32 %v954, %v994
        %v996 = vpop.f32.mrf.mxu0
        %v997 = vpop.f32.mrf.mxu0
        %v998 = vadd.f32 %v957, %v997
        %v999 = vpop.f32.mrf.mxu0
        %1000 = vdwg.mxu0
        %v1004 = vrot.slane %v911, 1
        %v1005 = vrot.slane %v913, 1
        %v1006 = vrot.slane %v995, 1
        %1007 = vrot.lane.b32.xlu0 %v1004, 127
        %v1008 = vpop.permute.xlu0 %1007
        %1009 = vrot.lane.b32.xlu0 %v1005, 127
        %v1010 = vpop.permute.xlu0 %1009
        %1011 = vrot.lane.b32.xlu0 %v1006, 127
        %v1012 = vpop.permute.xlu0 %1011
        %vm1013 = vcmask 1039360
        %v1014 = vsel %vm1013, %v1008, %v1010
        %v1015 = vsel %vm1013, %v1010, %v1012
        %v1019 = vadd.f32 %v911, %v1014
        %v1020 = vadd.f32 %v913, %v1015
        %v1021 = vadd.f32 %v995, %v1012
        %v1022 = vrot.slane %v911, 2
        %v1023 = vrot.slane %v913, 2
        %v1024 = vrot.slane %v995, 2
        %1025 = vrot.lane.b32.xlu0 %v1022, 126
        %v1026 = vpop.permute.xlu0 %1025
        %1027 = vrot.lane.b32.xlu0 %v1023, 126
        %v1028 = vpop.permute.xlu0 %1027
        %1029 = vrot.lane.b32.xlu0 %v1024, 126
        %v1030 = vpop.permute.xlu0 %1029
        %vm1031 = vcmask 1031168
        %v1032 = vsel %vm1031, %v1026, %v1028
        %v1033 = vsel %vm1031, %v1028, %v1030
        %v1037 = vadd.f32 %v1019, %v1032
        %v1038 = vadd.f32 %v1020, %v1033
        %v1039 = vadd.f32 %v1021, %v1030
        %v1040 = vrot.slane %v911, 3
        %v1041 = vrot.slane %v913, 3
        %v1042 = vrot.slane %v995, 3
        %1043 = vrot.lane.b32.xlu0 %v1040, 110
        %v1044 = vpop.permute.xlu0 %1043
        %1045 = vrot.lane.b32.xlu0 %v1041, 110
        %v1046 = vpop.permute.xlu0 %1045
        %1047 = vrot.lane.b32.xlu0 %v1042, 110
        %v1048 = vpop.permute.xlu0 %1047
        %vm1049 = vcmask 900096
        %v1050 = vsel %vm1049, %v1044, %v1046
        %v1051 = vsel %vm1049, %v1046, %v1048
        %v1055 = vadd.f32 %v1037, %v1050
        %v1056 = vadd.f32 %v1038, %v1051
        %v1057 = vadd.f32 %v1039, %v1048
        %v1058 = vrot.slane %v911, 4
        %v1059 = vrot.slane %v913, 4
        %v1060 = vrot.slane %v995, 4
        %1061 = vrot.lane.b32.xlu0 %v1058, 109
        %v1062 = vpop.permute.xlu0 %1061
        %1063 = vrot.lane.b32.xlu0 %v1059, 109
        %v1064 = vpop.permute.xlu0 %1063
        %1065 = vrot.lane.b32.xlu0 %v1060, 109
        %v1066 = vpop.permute.xlu0 %1065
        %vm1067 = vcmask 891904
        %v1068 = vsel %vm1067, %v1062, %v1064
        %v1069 = vsel %vm1067, %v1064, %v1066
        %v1073 = vadd.f32 %v1055, %v1068
        %v1074 = vadd.f32 %v1056, %v1069
        %v1075 = vadd.f32 %v1057, %v1066
        %v1076 = vrot.slane %v911, 5
        %v1077 = vrot.slane %v913, 5
        %v1078 = vrot.slane %v995, 5
        %1079 = vrot.lane.b32.xlu0 %v1076, 108
        %v1080 = vpop.permute.xlu0 %1079
        %1081 = vrot.lane.b32.xlu0 %v1077, 108
        %v1082 = vpop.permute.xlu0 %1081
        %1083 = vrot.lane.b32.xlu0 %v1078, 108
        %v1084 = vpop.permute.xlu0 %1083
        %vm1085 = vcmask 883712
        %v1086 = vsel %vm1085, %v1080, %v1082
        %v1087 = vsel %vm1085, %v1082, %v1084
        %v1091 = vadd.f32 %v1073, %v1086
        %v1092 = vadd.f32 %v1074, %v1087
        %v1093 = vadd.f32 %v1075, %v1084
        %v1094 = vrot.slane %v911, 6
        %v1095 = vrot.slane %v913, 6
        %v1096 = vrot.slane %v995, 6
        %1097 = vrot.lane.b32.xlu0 %v1094, 92
        %v1098 = vpop.permute.xlu0 %1097
        %1099 = vrot.lane.b32.xlu0 %v1095, 92
        %v1100 = vpop.permute.xlu0 %1099
        %1101 = vrot.lane.b32.xlu0 %v1096, 92
        %v1102 = vpop.permute.xlu0 %1101
        %vm1103 = vcmask 752640
        %v1104 = vsel %vm1103, %v1098, %v1100
        %v1105 = vsel %vm1103, %v1100, %v1102
        %v1109 = vadd.f32 %v1091, %v1104
        %v1110 = vadd.f32 %v1092, %v1105
        %v1111 = vadd.f32 %v1093, %v1102
        %v1112 = vrot.slane %v911, 7
        %v1113 = vrot.slane %v913, 7
        %v1114 = vrot.slane %v995, 7
        %1115 = vrot.lane.b32.xlu0 %v1112, 91
        %v1116 = vpop.permute.xlu0 %1115
        %1117 = vrot.lane.b32.xlu0 %v1113, 91
        %v1118 = vpop.permute.xlu0 %1117
        %1119 = vrot.lane.b32.xlu0 %v1114, 91
        %v1120 = vpop.permute.xlu0 %1119
        %vm1121 = vcmask 744448
        %v1122 = vsel %vm1121, %v1116, %v1118
        %v1123 = vsel %vm1121, %v1118, %v1120
        %v1127 = vadd.f32 %v1109, %v1122
        %v1128 = vadd.f32 %v1110, %v1123
        %v1129 = vadd.f32 %v1111, %v1120
        %1133 = vrot.lane.b32.xlu0 %v915, 90
        %v1134 = vpop.permute.xlu0 %1133
        %1135 = vrot.lane.b32.xlu0 %v917, 90
        %v1136 = vpop.permute.xlu0 %1135
        %1137 = vrot.lane.b32.xlu0 %v998, 90
        %v1138 = vpop.permute.xlu0 %1137
        %vm1139 = vcmask 736256
        %v1140 = vsel %vm1139, %v1134, %v1136
        %v1141 = vsel %vm1139, %v1136, %v1138
        %v1145 = vadd.f32 %v1127, %v1140
        %v1146 = vadd.f32 %v1128, %v1141
        %v1147 = vadd.f32 %v1129, %v1138
        %v1148 = vadd.f32 %v1145, 0.045187492
        %v1149 = vadd.f32 %v1146, 0.045187492
        %v1150 = vadd.f32 %v1147, 0.045187492
        %vm1151 = vcmp.gt.f32.partialorder %v1148, 0.0
        %vm1152 = vcmp.gt.f32.partialorder %v1149, 0.0
        %vm1153 = vcmp.gt.f32.partialorder %v1150, 0.0
        %v1154 = vmul.f32 %v1148, 0.2
        %v1155 = vmul.f32 %v1149, 0.2
        %v1156 = vmul.f32 %v1150, 0.2
        %v1157 = vsel %vm1151, %v1148, %v1154
        %v1158 = vsel %vm1152, %v1149, %v1155
        %v1159 = vsel %vm1153, %v1150, %v1156
        %v1160 = vpack.c.bf16 %v1157, %v1157
        %v1161 = vpack.c.bf16 %v1158, %v1158
        %v1162 = vpack.c.bf16 %v1159, %v1159
        %v1163 = vld [vmem:[%s2] sm:$0xff]
        %v1164 = vld [vmem:[%s2 + $0x8] sm:$0xff]
        %v1165 = vld [vmem:[%s2 + $0x10] sm:$0xff]
        %v1166 = vld [vmem:[%s2 + $0x18] sm:$0xff]
        %v1167 = vld [vmem:[%s2 + $0x20] sm:$0xff]
        %v1168 = vld [vmem:[%s2 + $0x28] sm:$0xff]
        %v1169 = vld [vmem:[%s2 + $0x30] sm:$0xff]
        %v1170 = vld [vmem:[%s2 + $0x38] sm:$0xff]
        %v1171 = vld [vmem:[%s2 + $0x40] sm:$0xff]
        %v1172 = vld [vmem:[%s2 + $0x48] sm:$0xff]
        %v1173 = vld [vmem:[%s2 + $0x50] sm:$0xff]
        %v1174 = vld [vmem:[%s2 + $0x58] sm:$0xff]
        %v1175 = vld [vmem:[%s2 + $0x60] sm:$0xff]
        %v1176 = vld [vmem:[%s2 + $0x68] sm:$0xff]
        %v1177 = vld [vmem:[%s2 + $0x70] sm:$0xff]
        %v1178 = vld [vmem:[%s2 + $0x78] sm:$0xff]
        %v1179 = vld [vmem:[%s2 + $0x80] sm:$0xff]
        %v1180 = vld [vmem:[%s2 + $0x88] sm:$0xff]
        %v1181 = vld [vmem:[%s2 + $0x90] sm:$0xff]
        %v1182 = vld [vmem:[%s2 + $0x98] sm:$0xff]
        %v1183 = vld [vmem:[%s2 + $0xa0] sm:$0xff]
        %v1184 = vld [vmem:[%s2 + $0xa8] sm:$0xff]
        %v1185 = vld [vmem:[%s2 + $0xb0] sm:$0xff]
        %v1186 = vld [vmem:[%s2 + $0xb8] sm:$0xff]
        %v1187 = vld [vmem:[%s2 + $0xc0] sm:$0xff]
        %v1188 = vld [vmem:[%s2 + $0xc8] sm:$0xff]
        %v1189 = vld [vmem:[%s2 + $0xd0] sm:$0xff]
        %v1190 = vld [vmem:[%s2 + $0xd8] sm:$0xff]
        %v1191 = vld [vmem:[%s2 + $0xe0] sm:$0xff]
        %v1192 = vld [vmem:[%s2 + $0xe8] sm:$0xff]
        %v1193 = vld [vmem:[%s2 + $0xf0] sm:$0xff]
        %v1194 = vld [vmem:[%s2 + $0xf8] sm:$0xff]
        %v1195 = vld [vmem:[%s2 + $0x100] sm:$0xff]
        %v1196 = vld [vmem:[%s2 + $0x108] sm:$0xff]
        %v1197 = vld [vmem:[%s2 + $0x110] sm:$0xff]
        %v1198 = vld [vmem:[%s2 + $0x118] sm:$0xff]
        %v1199 = vld [vmem:[%s2 + $0x120] sm:$0xff]
        %v1200 = vld [vmem:[%s2 + $0x128] sm:$0xff]
        %v1201 = vld [vmem:[%s2 + $0x130] sm:$0xff]
        %v1202 = vld [vmem:[%s2 + $0x138] sm:$0xff]
        %v1203 = vld [vmem:[%s2 + $0x140] sm:$0xff]
        %v1204 = vld [vmem:[%s2 + $0x148] sm:$0xff]
        %v1205 = vld [vmem:[%s2 + $0x150] sm:$0xff]
        %v1206 = vld [vmem:[%s2 + $0x158] sm:$0xff]
        %v1207 = vld [vmem:[%s2 + $0x160] sm:$0xff]
        %v1208 = vld [vmem:[%s2 + $0x168] sm:$0xff]
        %v1209 = vld [vmem:[%s2 + $0x170] sm:$0xff]
        %v1210 = vld [vmem:[%s2 + $0x178] sm:$0xff]
        %v1211 = vld [vmem:[%s2 + $0x180] sm:$0xff]
        %v1212 = vld [vmem:[%s2 + $0x188] sm:$0xff]
        %v1213 = vld [vmem:[%s2 + $0x190] sm:$0xff]
        %v1214 = vld [vmem:[%s2 + $0x198] sm:$0xff]
        %v1215 = vld [vmem:[%s2 + $0x1a0] sm:$0xff]
        %v1216 = vld [vmem:[%s2 + $0x1a8] sm:$0xff]
        %v1217 = vld [vmem:[%s2 + $0x1b0] sm:$0xff]
        %v1218 = vld [vmem:[%s2 + $0x1b8] sm:$0xff]
        %v1219 = vld [vmem:[%s2 + $0x1c0] sm:$0xff]
        %v1220 = vld [vmem:[%s2 + $0x1c8] sm:$0xff]
        %v1221 = vld [vmem:[%s2 + $0x1d0] sm:$0xff]
        %v1222 = vld [vmem:[%s2 + $0x1d8] sm:$0xff]
        %v1223 = vld [vmem:[%s2 + $0x1e0] sm:$0xff]
        %v1224 = vld [vmem:[%s2 + $0x1e8] sm:$0xff]
        %v1225 = vld [vmem:[%s2 + $0x1f0] sm:$0xff]
        %v1226 = vld [vmem:[%s2 + $0x1f8] sm:$0xff]
        %v1227 = vld [vmem:[%s2 + $0x200] sm:$0xff]
        %v1228 = vld [vmem:[%s2 + $0x208] sm:$0xff]
        %v1229 = vld [vmem:[%s2 + $0x210] sm:$0xff]
        %v1230 = vld [vmem:[%s2 + $0x218] sm:$0xff]
        %v1231 = vld [vmem:[%s2 + $0x220] sm:$0xff]
        %v1232 = vld [vmem:[%s2 + $0x228] sm:$0xff]
        %v1233 = vld [vmem:[%s2 + $0x230] sm:$0x77]
        %v1234 = vld [vmem:[%s2 + $0x238] sm:$0x77]
        %v1307 = vunpack.c.l.b16 %v1163
        %v1308 = vunpack.c.h.b16 %v1163
        %v1309 = vunpack.c.l.b16 %v1164
        %v1310 = vunpack.c.h.b16 %v1164
        %v1311 = vunpack.c.l.b16 %v1165
        %v1312 = vunpack.c.h.b16 %v1165
        %v1313 = vunpack.c.l.b16 %v1166
        %v1314 = vunpack.c.h.b16 %v1166
        %v1315 = vunpack.c.l.b16 %v1167
        %v1316 = vunpack.c.h.b16 %v1167
        %v1317 = vunpack.c.l.b16 %v1168
        %v1318 = vunpack.c.h.b16 %v1168
        %v1319 = vunpack.c.l.b16 %v1169
        %v1320 = vunpack.c.h.b16 %v1169
        %v1321 = vunpack.c.l.b16 %v1170
        %v1322 = vunpack.c.h.b16 %v1170
        %v1323 = vunpack.c.l.b16 %v1171
        %v1324 = vunpack.c.h.b16 %v1171
        %v1325 = vunpack.c.l.b16 %v1172
        %v1326 = vunpack.c.h.b16 %v1172
        %v1327 = vunpack.c.l.b16 %v1173
        %v1328 = vunpack.c.h.b16 %v1173
        %v1329 = vunpack.c.l.b16 %v1174
        %v1330 = vunpack.c.h.b16 %v1174
        %v1331 = vunpack.c.l.b16 %v1175
        %v1332 = vunpack.c.h.b16 %v1175
        %v1333 = vunpack.c.l.b16 %v1176
        %v1334 = vunpack.c.h.b16 %v1176
        %v1335 = vunpack.c.l.b16 %v1177
        %v1336 = vunpack.c.h.b16 %v1177
        %v1337 = vunpack.c.l.b16 %v1178
        %v1338 = vunpack.c.h.b16 %v1178
        %v1339 = vunpack.c.l.b16 %v1179
        %v1340 = vunpack.c.h.b16 %v1179
        %v1341 = vunpack.c.l.b16 %v1180
        %v1342 = vunpack.c.h.b16 %v1180
        %v1343 = vunpack.c.l.b16 %v1181
        %v1344 = vunpack.c.h.b16 %v1181
        %v1345 = vunpack.c.l.b16 %v1182
        %v1346 = vunpack.c.h.b16 %v1182
        %v1347 = vunpack.c.l.b16 %v1183
        %v1348 = vunpack.c.h.b16 %v1183
        %v1349 = vunpack.c.l.b16 %v1184
        %v1350 = vunpack.c.h.b16 %v1184
        %v1351 = vunpack.c.l.b16 %v1185
        %v1352 = vunpack.c.h.b16 %v1185
        %v1353 = vunpack.c.l.b16 %v1186
        %v1354 = vunpack.c.h.b16 %v1186
        %v1355 = vunpack.c.l.b16 %v1187
        %v1356 = vunpack.c.h.b16 %v1187
        %v1357 = vunpack.c.l.b16 %v1188
        %v1358 = vunpack.c.h.b16 %v1188
        %v1359 = vunpack.c.l.b16 %v1189
        %v1360 = vunpack.c.h.b16 %v1189
        %v1361 = vunpack.c.l.b16 %v1190
        %v1362 = vunpack.c.h.b16 %v1190
        %v1363 = vunpack.c.l.b16 %v1191
        %v1364 = vunpack.c.h.b16 %v1191
        %v1365 = vunpack.c.l.b16 %v1192
        %v1366 = vunpack.c.h.b16 %v1192
        %v1367 = vunpack.c.l.b16 %v1193
        %v1368 = vunpack.c.h.b16 %v1193
        %v1369 = vunpack.c.l.b16 %v1194
        %v1370 = vunpack.c.h.b16 %v1194
        %v1371 = vunpack.c.l.b16 %v1195
        %v1372 = vunpack.c.h.b16 %v1195
        %v1373 = vunpack.c.l.b16 %v1196
        %v1374 = vunpack.c.h.b16 %v1196
        %v1375 = vunpack.c.l.b16 %v1197
        %v1376 = vunpack.c.h.b16 %v1197
        %v1377 = vunpack.c.l.b16 %v1198
        %v1378 = vunpack.c.h.b16 %v1198
        %v1379 = vunpack.c.l.b16 %v1199
        %v1380 = vunpack.c.h.b16 %v1199
        %v1381 = vunpack.c.l.b16 %v1200
        %v1382 = vunpack.c.h.b16 %v1200
        %v1383 = vunpack.c.l.b16 %v1201
        %v1384 = vunpack.c.h.b16 %v1201
        %v1385 = vunpack.c.l.b16 %v1202
        %v1386 = vunpack.c.h.b16 %v1202
        %v1387 = vunpack.c.l.b16 %v1203
        %v1388 = vunpack.c.h.b16 %v1203
        %v1389 = vunpack.c.l.b16 %v1204
        %v1390 = vunpack.c.h.b16 %v1204
        %v1391 = vunpack.c.l.b16 %v1205
        %v1392 = vunpack.c.h.b16 %v1205
        %v1393 = vunpack.c.l.b16 %v1206
        %v1394 = vunpack.c.h.b16 %v1206
        %v1395 = vunpack.c.l.b16 %v1207
        %v1396 = vunpack.c.h.b16 %v1207
        %v1397 = vunpack.c.l.b16 %v1208
        %v1398 = vunpack.c.h.b16 %v1208
        %v1399 = vunpack.c.l.b16 %v1209
        %v1400 = vunpack.c.h.b16 %v1209
        %v1401 = vunpack.c.l.b16 %v1210
        %v1402 = vunpack.c.h.b16 %v1210
        %v1403 = vunpack.c.l.b16 %v1211
        %v1404 = vunpack.c.h.b16 %v1211
        %v1405 = vunpack.c.l.b16 %v1212
        %v1406 = vunpack.c.h.b16 %v1212
        %v1407 = vunpack.c.l.b16 %v1213
        %v1408 = vunpack.c.h.b16 %v1213
        %v1409 = vunpack.c.l.b16 %v1214
        %v1410 = vunpack.c.h.b16 %v1214
        %v1411 = vunpack.c.l.b16 %v1215
        %v1412 = vunpack.c.h.b16 %v1215
        %v1413 = vunpack.c.l.b16 %v1216
        %v1414 = vunpack.c.h.b16 %v1216
        %v1415 = vunpack.c.l.b16 %v1217
        %v1416 = vunpack.c.h.b16 %v1217
        %v1417 = vunpack.c.l.b16 %v1218
        %v1418 = vunpack.c.h.b16 %v1218
        %v1419 = vunpack.c.l.b16 %v1219
        %v1420 = vunpack.c.h.b16 %v1219
        %v1421 = vunpack.c.l.b16 %v1220
        %v1422 = vunpack.c.h.b16 %v1220
        %v1423 = vunpack.c.l.b16 %v1221
        %v1424 = vunpack.c.h.b16 %v1221
        %v1425 = vunpack.c.l.b16 %v1222
        %v1426 = vunpack.c.h.b16 %v1222
        %v1427 = vunpack.c.l.b16 %v1223
        %v1428 = vunpack.c.h.b16 %v1223
        %v1429 = vunpack.c.l.b16 %v1224
        %v1430 = vunpack.c.h.b16 %v1224
        %v1431 = vunpack.c.l.b16 %v1225
        %v1432 = vunpack.c.h.b16 %v1225
        %v1433 = vunpack.c.l.b16 %v1226
        %v1434 = vunpack.c.h.b16 %v1226
        %v1435 = vunpack.c.l.b16 %v1227
        %v1436 = vunpack.c.h.b16 %v1227
        %v1437 = vunpack.c.l.b16 %v1228
        %v1438 = vunpack.c.h.b16 %v1228
        %v1439 = vunpack.c.l.b16 %v1229
        %v1440 = vunpack.c.h.b16 %v1229
        %v1441 = vunpack.c.l.b16 %v1230
        %v1442 = vunpack.c.h.b16 %v1230
        %v1443 = vunpack.c.l.b16 %v1231
        %v1444 = vunpack.c.h.b16 %v1231
        %v1445 = vunpack.c.l.b16 %v1232
        %v1446 = vunpack.c.h.b16 %v1232
        %v1447 = vunpack.c.l.b16 %v1233
        %v1448 = vunpack.c.h.b16 %v1233
        %v1449 = vunpack.c.l.b16 %v1234
        %v1450 = vunpack.c.h.b16 %v1234
        %v1451 = vpack.c.b16 %v1311, %v1307
        %v1452 = vpack.c.b16 %v1312, %v1308
        %v1453 = vpack.c.b16 %v1313, %v1309
        %v1454 = vpack.c.b16 %v1314, %v1310
        %v1455 = vpack.c.b16 %v1319, %v1315
        %v1456 = vpack.c.b16 %v1320, %v1316
        %v1457 = vpack.c.b16 %v1321, %v1317
        %v1458 = vpack.c.b16 %v1322, %v1318
        %v1459 = vpack.c.b16 %v1327, %v1323
        %v1460 = vpack.c.b16 %v1328, %v1324
        %v1461 = vpack.c.b16 %v1329, %v1325
        %v1462 = vpack.c.b16 %v1330, %v1326
        %v1463 = vpack.c.b16 %v1335, %v1331
        %v1464 = vpack.c.b16 %v1336, %v1332
        %v1465 = vpack.c.b16 %v1337, %v1333
        %v1466 = vpack.c.b16 %v1338, %v1334
        %v1467 = vpack.c.b16 %v1343, %v1339
        %v1468 = vpack.c.b16 %v1344, %v1340
        %v1469 = vpack.c.b16 %v1345, %v1341
        %v1470 = vpack.c.b16 %v1346, %v1342
        %v1471 = vpack.c.b16 %v1351, %v1347
        %v1472 = vpack.c.b16 %v1352, %v1348
        %v1473 = vpack.c.b16 %v1353, %v1349
        %v1474 = vpack.c.b16 %v1354, %v1350
        %v1475 = vpack.c.b16 %v1359, %v1355
        %v1476 = vpack.c.b16 %v1360, %v1356
        %v1477 = vpack.c.b16 %v1361, %v1357
        %v1478 = vpack.c.b16 %v1362, %v1358
        %v1479 = vpack.c.b16 %v1367, %v1363
        %v1480 = vpack.c.b16 %v1368, %v1364
        %v1481 = vpack.c.b16 %v1369, %v1365
        %v1482 = vpack.c.b16 %v1370, %v1366
        %v1483 = vpack.c.b16 %v1375, %v1371
        %v1484 = vpack.c.b16 %v1376, %v1372
        %v1485 = vpack.c.b16 %v1377, %v1373
        %v1486 = vpack.c.b16 %v1378, %v1374
        %v1487 = vpack.c.b16 %v1383, %v1379
        %v1488 = vpack.c.b16 %v1384, %v1380
        %v1489 = vpack.c.b16 %v1385, %v1381
        %v1490 = vpack.c.b16 %v1386, %v1382
        %v1491 = vpack.c.b16 %v1391, %v1387
        %v1492 = vpack.c.b16 %v1392, %v1388
        %v1493 = vpack.c.b16 %v1393, %v1389
        %v1494 = vpack.c.b16 %v1394, %v1390
        %v1495 = vpack.c.b16 %v1399, %v1395
        %v1496 = vpack.c.b16 %v1400, %v1396
        %v1497 = vpack.c.b16 %v1401, %v1397
        %v1498 = vpack.c.b16 %v1402, %v1398
        %v1499 = vpack.c.b16 %v1407, %v1403
        %v1500 = vpack.c.b16 %v1408, %v1404
        %v1501 = vpack.c.b16 %v1409, %v1405
        %v1502 = vpack.c.b16 %v1410, %v1406
        %v1503 = vpack.c.b16 %v1415, %v1411
        %v1504 = vpack.c.b16 %v1416, %v1412
        %v1505 = vpack.c.b16 %v1417, %v1413
        %v1506 = vpack.c.b16 %v1418, %v1414
        %v1507 = vpack.c.b16 %v1423, %v1419
        %v1508 = vpack.c.b16 %v1424, %v1420
        %v1509 = vpack.c.b16 %v1425, %v1421
        %v1510 = vpack.c.b16 %v1426, %v1422
        %v1511 = vpack.c.b16 %v1431, %v1427
        %v1512 = vpack.c.b16 %v1432, %v1428
        %v1513 = vpack.c.b16 %v1433, %v1429
        %v1514 = vpack.c.b16 %v1434, %v1430
        %v1515 = vpack.c.b16 %v1439, %v1435
        %v1516 = vpack.c.b16 %v1440, %v1436
        %v1517 = vpack.c.b16 %v1441, %v1437
        %v1518 = vpack.c.b16 %v1442, %v1438
        %v1519 = vpack.c.b16 %v1447, %v1443
        %v1520 = vpack.c.b16 %v1448, %v1444
        %v1521 = vpack.c.b16 %v1449, %v1445
        %v1522 = vpack.c.b16 %v1450, %v1446
        %vm1591 = vcmask 244736
        %v1593 = vsel %vm1591, %v1162, 0
        %vm1595 = vcmask 1046528
        %v1597 = vsel %vm1595, %v1519, 0
        %v1600 = vsel %vm1595, %v1520, 0
        %v1603 = vsel %vm1595, %v1521, 0
        %v1606 = vsel %vm1595, %v1522, 0
        %1608 = vmatprep.subr.bf16.mxu0 %v1480
        %1609 = vmatpush1.bf16.msra.mxu0 %v1479
        %1610 = vmatprep.subr.bf16.mxu0 %v1476
        %1611 = vmatpush1.bf16.msra.mxu0 %v1475
        %1612 = vmatprep.subr.bf16.mxu0 %v1472
        %1613 = vmatpush1.bf16.msra.mxu0 %v1471
        %1614 = vmatprep.subr.bf16.mxu0 %v1468
        %1615 = vmatpush1.bf16.msra.mxu0 %v1467
        %1616 = vmatprep.subr.bf16.mxu0 %v1464
        %1617 = vmatpush1.bf16.msra.mxu0 %v1463
        %1618 = vmatprep.subr.bf16.mxu0 %v1460
        %1619 = vmatpush1.bf16.msra.mxu0 %v1459
        %1620 = vmatprep.subr.bf16.mxu0 %v1456
        %1621 = vmatpush1.bf16.msra.mxu0 %v1455
        %1622 = vmatprep.subr.bf16.mxu0 %v1452
        %1623 = vmatpush1.bf16.msra.mxu0 %v1451
        %1624 = vmatprep.subr.bf16.mxu0 %v1512
        %1625 = vmatpush2.bf16.msra.mxu0 %v1511
        %1626 = vmatprep.subr.bf16.mxu0 %v1508
        %1627 = vmatpush2.bf16.msra.mxu0 %v1507
        %1628 = vmatprep.subr.bf16.mxu0 %v1504
        %1629 = vmatpush2.bf16.msra.mxu0 %v1503
        %1630 = vmatprep.subr.bf16.mxu0 %v1500
        %1631 = vmatpush2.bf16.msra.mxu0 %v1499
        %1632 = vmatprep.subr.bf16.mxu0 %v1496
        %1633 = vmatpush2.bf16.msra.mxu0 %v1495
        %1634 = vmatprep.subr.bf16.mxu0 %v1492
        %1635 = vmatpush2.bf16.msra.mxu0 %v1491
        %1636 = vmatprep.subr.bf16.mxu0 %v1488
        %1637 = vmatpush2.bf16.msra.mxu0 %v1487
        %1638 = vmatprep.subr.bf16.mxu0 %v1484
        %1639 = vmatpush2.bf16.msra.mxu0 %v1483
        %1640 = vmatprep.mubr.bf16.mxu0 %v1161
        %1641 = vmatmul.mubr.bf16.gmra.mxu0 %v1160
        %v1642 = vpop.f32.mrf.mxu0
        %v1643 = vadd.f32 0.0, %v1642
        %v1644 = vpop.f32.mrf.mxu0
        %v1645 = vadd.f32 0.0, %v1644
        %v1646 = vpop.f32.mrf.mxu0
        %v1647 = vpop.f32.mrf.mxu0
        %1648 = vdwg.mxu0
        %1649 = vmatprep.subr.bf16.mxu0 0
        %1650 = vmatpush1.bf16.msra.mxu0 0
        %1651 = vmatprep.subr.bf16.mxu0 0
        %1652 = vmatpush1.bf16.msra.mxu0 0
        %1653 = vmatprep.subr.bf16.mxu0 0
        %1654 = vmatpush1.bf16.msra.mxu0 0
        %1655 = vmatprep.subr.bf16.mxu0 0
        %1656 = vmatpush1.bf16.msra.mxu0 0
        %1657 = vmatprep.subr.bf16.mxu0 0
        %1658 = vmatpush1.bf16.msra.mxu0 0
        %1659 = vmatprep.subr.bf16.mxu0 0
        %1660 = vmatpush1.bf16.msra.mxu0 0
        %1661 = vmatprep.subr.bf16.mxu0 %v1600
        %1662 = vmatpush1.bf16.msra.mxu0 %v1597
        %1663 = vmatprep.subr.bf16.mxu0 %v1516
        %1664 = vmatpush1.bf16.msra.mxu0 %v1515
        %1665 = vmatprep.subr.bf16.mxu0 0
        %1666 = vmatpush2.bf16.msra.mxu0 0
        %1667 = vmatprep.subr.bf16.mxu0 0
        %1668 = vmatpush2.bf16.msra.mxu0 0
        %1669 = vmatprep.subr.bf16.mxu0 0
        %1670 = vmatpush2.bf16.msra.mxu0 0
        %1671 = vmatprep.subr.bf16.mxu0 0
        %1672 = vmatpush2.bf16.msra.mxu0 0
        %1673 = vmatprep.subr.bf16.mxu0 0
        %1674 = vmatpush2.bf16.msra.mxu0 0
        %1675 = vmatprep.subr.bf16.mxu0 0
        %1676 = vmatpush2.bf16.msra.mxu0 0
        %1677 = vmatprep.subr.bf16.mxu0 0
        %1678 = vmatpush2.bf16.msra.mxu0 0
        %1679 = vmatprep.subr.bf16.mxu0 0
        %1680 = vmatpush2.bf16.msra.mxu0 0
        %1681 = vmatprep.mubr.bf16.mxu0 0
        %1682 = vmatmul.mubr.bf16.gmra.mxu0 %v1593
        %v1683 = vpop.f32.mrf.mxu0
        %v1684 = vadd.f32 %v1643, %v1683
        %v1685 = vpop.f32.mrf.mxu0
        %v1686 = vadd.f32 %v1645, %v1685
        %v1687 = vpop.f32.mrf.mxu0
        %v1688 = vpop.f32.mrf.mxu0
        %1689 = vdwg.mxu0
        %1690 = vmatprep.subr.bf16.mxu0 %v1482
        %1691 = vmatpush1.bf16.msra.mxu0 %v1481
        %1692 = vmatprep.subr.bf16.mxu0 %v1478
        %1693 = vmatpush1.bf16.msra.mxu0 %v1477
        %1694 = vmatprep.subr.bf16.mxu0 %v1474
        %1695 = vmatpush1.bf16.msra.mxu0 %v1473
        %1696 = vmatprep.subr.bf16.mxu0 %v1470
        %1697 = vmatpush1.bf16.msra.mxu0 %v1469
        %1698 = vmatprep.subr.bf16.mxu0 %v1466
        %1699 = vmatpush1.bf16.msra.mxu0 %v1465
        %1700 = vmatprep.subr.bf16.mxu0 %v1462
        %1701 = vmatpush1.bf16.msra.mxu0 %v1461
        %1702 = vmatprep.subr.bf16.mxu0 %v1458
        %1703 = vmatpush1.bf16.msra.mxu0 %v1457
        %1704 = vmatprep.subr.bf16.mxu0 %v1454
        %1705 = vmatpush1.bf16.msra.mxu0 %v1453
        %1706 = vmatprep.subr.bf16.mxu0 %v1514
        %1707 = vmatpush2.bf16.msra.mxu0 %v1513
        %1708 = vmatprep.subr.bf16.mxu0 %v1510
        %1709 = vmatpush2.bf16.msra.mxu0 %v1509
        %1710 = vmatprep.subr.bf16.mxu0 %v1506
        %1711 = vmatpush2.bf16.msra.mxu0 %v1505
        %1712 = vmatprep.subr.bf16.mxu0 %v1502
        %1713 = vmatpush2.bf16.msra.mxu0 %v1501
        %1714 = vmatprep.subr.bf16.mxu0 %v1498
        %1715 = vmatpush2.bf16.msra.mxu0 %v1497
        %1716 = vmatprep.subr.bf16.mxu0 %v1494
        %1717 = vmatpush2.bf16.msra.mxu0 %v1493
        %1718 = vmatprep.subr.bf16.mxu0 %v1490
        %1719 = vmatpush2.bf16.msra.mxu0 %v1489
        %1720 = vmatprep.subr.bf16.mxu0 %v1486
        %1721 = vmatpush2.bf16.msra.mxu0 %v1485
        %1722 = vmatprep.mubr.bf16.mxu0 %v1161
        %1723 = vmatmul.mubr.bf16.gmra.mxu0 %v1160
        %v1724 = vpop.f32.mrf.mxu0
        %v1725 = vadd.f32 0.0, %v1724
        %v1726 = vpop.f32.mrf.mxu0
        %v1727 = vadd.f32 0.0, %v1726
        %v1728 = vpop.f32.mrf.mxu0
        %v1729 = vpop.f32.mrf.mxu0
        %1730 = vdwg.mxu0
        %1731 = vmatprep.subr.bf16.mxu0 0
        %1732 = vmatpush1.bf16.msra.mxu0 0
        %1733 = vmatprep.subr.bf16.mxu0 0
        %1734 = vmatpush1.bf16.msra.mxu0 0
        %1735 = vmatprep.subr.bf16.mxu0 0
        %1736 = vmatpush1.bf16.msra.mxu0 0
        %1737 = vmatprep.subr.bf16.mxu0 0
        %1738 = vmatpush1.bf16.msra.mxu0 0
        %1739 = vmatprep.subr.bf16.mxu0 0
        %1740 = vmatpush1.bf16.msra.mxu0 0
        %1741 = vmatprep.subr.bf16.mxu0 0
        %1742 = vmatpush1.bf16.msra.mxu0 0
        %1743 = vmatprep.subr.bf16.mxu0 %v1606
        %1744 = vmatpush1.bf16.msra.mxu0 %v1603
        %1745 = vmatprep.subr.bf16.mxu0 %v1518
        %1746 = vmatpush1.bf16.msra.mxu0 %v1517
        %1747 = vmatprep.subr.bf16.mxu0 0
        %1748 = vmatpush2.bf16.msra.mxu0 0
        %1749 = vmatprep.subr.bf16.mxu0 0
        %1750 = vmatpush2.bf16.msra.mxu0 0
        %1751 = vmatprep.subr.bf16.mxu0 0
        %1752 = vmatpush2.bf16.msra.mxu0 0
        %1753 = vmatprep.subr.bf16.mxu0 0
        %1754 = vmatpush2.bf16.msra.mxu0 0
        %1755 = vmatprep.subr.bf16.mxu0 0
        %1756 = vmatpush2.bf16.msra.mxu0 0
        %1757 = vmatprep.subr.bf16.mxu0 0
        %1758 = vmatpush2.bf16.msra.mxu0 0
        %1759 = vmatprep.subr.bf16.mxu0 0
        %1760 = vmatpush2.bf16.msra.mxu0 0
        %1761 = vmatprep.subr.bf16.mxu0 0
        %1762 = vmatpush2.bf16.msra.mxu0 0
        %1763 = vmatprep.mubr.bf16.mxu0 0
        %1764 = vmatmul.mubr.bf16.gmra.mxu0 %v1593
        %v1765 = vpop.f32.mrf.mxu0
        %v1766 = vadd.f32 %v1725, %v1765
        %v1767 = vpop.f32.mrf.mxu0
        %v1768 = vadd.f32 %v1727, %v1767
        %v1769 = vpop.f32.mrf.mxu0
        %v1770 = vpop.f32.mrf.mxu0
        %1771 = vdwg.mxu0
        %v1772 = vmax.f32 %v1684, %v1686
        %v1773 = vmax.f32 %v1772, %v1766
        %v1774 = vmax.f32 %v1773, %v1768
        %v1775 = vadd.f32 %v1774, -0.02
        %1776 = vst [vmem:[%s162] sm:$0x1] %v1775
        %s1777 = sand.u32 %s93, 1
        %s1778 = scalar_lea.sflag [#allocation3], %s1777
        %s1779 = sand.u32 %s93, 1
        %s1780 = scalar_lea.vmem [#allocation2], %s1779
        // Predicated region
        $region33: #{tpu_custom_call.1} parent=31 // pred_check
          %p1781 = pneg %p103
        $region34: #{tpu_custom_call.1} parent=31 // pred_check_branch
          %1783 = sbr.rel (%p1781) target = $region36
        $region35: #{tpu_custom_call.1} parent=31 // pred_region
          %s1785 = ssub.s32 16, 16
          %1786 = vsyncadd %s1778, %s1785
          %s1787 = smul.addr %s17, 16
          %s1788 = scalar_lea.hbm %s3, %s1787
          %s1790 = sshll.u32 %s1780, 4
          %s1791 = int_to_ptr.vmem [resolvable:$true] %s1790
          %1793 = dma.vmem_to_hbm [thread:$0]  %s1791, 16, %s1788, %s1778
        $region36: #{tpu_custom_call.1} parent=31 // pred_fallthru
          _
      $region32: #{tpu_custom_call.1} parent=5 // pred_fallthru
        _
      %p1794 = scmp.le.s32.totalorder 2, %s12
      // Predicated region
      $region37: #{tpu_custom_call.1} parent=5 // pred_check
        %p1795 = pneg %p1794
      $region38: #{tpu_custom_call.1} parent=5 // pred_check_branch
        %1797 = sbr.rel (%p1795) target = $region40
      $region39: #{tpu_custom_call.1} parent=5 // pred_region
        %s1798 = ssub.s32 %s12, 2
        // Predicated region
        $region41: #{tpu_custom_call.1} parent=39 // pred_check
          %p1799 = pneg %p109
        $region42: #{tpu_custom_call.1} parent=39 // pred_check_branch
          %1801 = sbr.rel (%p1799) target = $region44
        $region43: #{tpu_custom_call.1} parent=39 // pred_region
          %s1802 = sand.u32 %s94, 1
          %s1803 = scalar_lea.sflag [#allocation3], %s1802
          %s1804 = sand.u32 %s94, 1
          %s1805 = scalar_lea.vmem [#allocation2], %s1804
          %1806 = dma.done %s1803, 16
        $region44: #{tpu_custom_call.1} parent=39 // pred_fallthru
          _
      $region40: #{tpu_custom_call.1} parent=5 // pred_fallthru
        _
    $region6: #{tpu_custom_call.1} parent=1 // loop_footer
      %s16 = sadd.s32 1, %s12
    $region7: #{tpu_custom_call.1} parent=1 // loop_footer_branch
      %11 = sbr.rel target = $region3
    $region8: #{tpu_custom_call.1} parent=1 // loop_exit
      _
    %1807 = vsyncpa [#allocation3], 1
    %s1808 = scalar_lea.sflag [#allocation3], 1
    %1809 = vsyncpa %s1808, 1

</llo_original>
